<compile_context>
chip_gen: v5e
topology: v5e:2x2
jax: 0.10.0
libtpu: 0.0.40
codegen_flags: <defaults>
</compile_context>

<pallas_src>
import functools
import math

import jax
import jax.numpy as jnp
from jax import lax
from jax.experimental import pallas as pl
from jax.experimental.pallas import tpu as pltpu


_INV_SQRT2 = 1.0 / math.sqrt(2.0)


# ----------------------------- Pallas kernel ------------------------------- #

def _fused_conv_kernel(xe_ref, xo_ref, w_ref, b_ref, o_ref, *,
                       block_rows, wo_p, apply_gelu, approx_gelu):
    """One (batch, row-tile) step of 3x3/stride-2 conv + folded BN [+ GELU].

    xe_ref : ((Ho_pad+1)*Wp, 3*Cin)  even padded-row width-im2col (per-image resident)
    xo_ref : ( Ho_pad   *Wp, 3*Cin)  odd  padded-row width-im2col (per-image resident)
    w_ref  : (3, 3*Cin, Cout)        BN-scale-folded weights, one slab per kh tap
    b_ref  : (1, Cout)               folded bias (f32)
    o_ref  : (block_rows*Wp, Cout)   output row tile (flattened rows x width)
    """
    m = block_rows * wo_p                               # batched-matmul M (static)
    off = pl.multiple_of(pl.program_id(1) * m, 16)

    x0 = xe_ref[pl.ds(off, m), :]                       # kh = 0 : padded rows 2*ho
    x1 = xo_ref[pl.ds(off, m), :]                       # kh = 1 : padded rows 2*ho+1
    x2 = xe_ref[pl.ds(pl.multiple_of(off + wo_p, 16), m), :]   # kh = 2 : rows 2*ho+2

    acc = jnp.dot(x0, w_ref[0], preferred_element_type=jnp.float32)
    acc = acc + jnp.dot(x1, w_ref[1], preferred_element_type=jnp.float32)
    acc = acc + jnp.dot(x2, w_ref[2], preferred_element_type=jnp.float32)

    y = acc + b_ref[...]                                # (M, Cout) + (1, Cout)
    if apply_gelu:
        if approx_gelu:
            # tanh approximation (EUP path; optional, off by default).
            y = 0.5 * y * (1.0 + jnp.tanh(0.7978845608028654 *
                                          (y + 0.044715 * y * y * y)))
        else:
            # Exact erf GELU, matching nn.GELU() default.
            y = 0.5 * y * (1.0 + lax.erf(y * _INV_SQRT2))
    o_ref[...] = y.astype(o_ref.dtype)


# ------------------------------ helpers ------------------------------------ #

def _round_up(n, m):
    return ((n + m - 1) // m) * m


def _padded_block_bytes(shape, dtype):
    """VMEM bytes of one block including Mosaic lane/sublane tile padding."""
    itemsize = jnp.dtype(dtype).itemsize
    dims = list(shape)
    if not dims:
        return itemsize
    sublane = {4: 8, 2: 16, 1: 32}.get(itemsize, 8)
    dims[-1] = _round_up(dims[-1], 128)
    if len(dims) >= 2:
        dims[-2] = _round_up(dims[-2], sublane)
    n = 1
    for d in dims:
        n *= d
    return n * itemsize


def _vmem_capacity_bytes():
    try:
        cap = getattr(pltpu.get_tpu_info(), "vmem_capacity_bytes", None)
        if cap:
            return int(cap)
    except Exception:
        pass
    return 64 << 20   # conservative fallback (v7x per-TensorCore VMEM)


# ------------------------------ JAX wrapper -------------------------------- #

def conv3x3_s2_bn(x_nhwc, w_oihw, conv_bias, gamma, beta, mean, var, *,
                  apply_gelu, out_dtype, eps=1e-5, rows_per_step=32,
                  approx_gelu=False):
    """3x3 stride-2 pad-1 conv + BN(eval) [+ GELU] as a fused Pallas kernel.

    Returns NHWC output (B, Ho, Wo, Cout) plus (Ho, Wo).
    """
    B, H, W, Cin = x_nhwc.shape
    Cout = w_oihw.shape[0]
    K = 3 * Cin
    Ho = (H + 2 - 3) // 2 + 1
    Wo = (W + 2 - 3) // 2 + 1

    # Row tile / padded extents (lane & sublane friendly, no divisor hunting).
    Wo_p = _round_up(Wo, 16)                 # 16-aligned width -> aligned slices/stores
    tr = Ho if Ho <= rows_per_step else rows_per_step
    n_rt = pl.cdiv(Ho, tr)
    Ho_pad = n_rt * tr
    M = tr * Wo_p                            # rows of the batched matmul per tile

    # ---- wrapper prep: pad + width-im2col split by padded-row parity ------
    xb = x_nhwc.astype(jnp.bfloat16)
    extra_h = max(0, 2 * Ho_pad + 1 - (H + 2))
    extra_w = max(0, 2 * Wo_p + 1 - (W + 2))
    xp = jnp.pad(xb, ((0, 0), (1, 1 + extra_h), (1, 1 + extra_w), (0, 0)))
    # xe[b, i, wo, kw*Cin+c] = xp[b, 2*i,   2*wo+kw, c]
    # xo[b, i, wo, kw*Cin+c] = xp[b, 2*i+1, 2*wo+kw, c]
    xe = jnp.concatenate(
        [xp[:, 0:2 * Ho_pad + 1:2, kw:kw + 2 * Wo_p - 1:2, :] for kw in range(3)],
        axis=-1)                                              # (B, Ho_pad+1, Wo_p, K)
    xo = jnp.concatenate(
        [xp[:, 1:2 * Ho_pad:2, kw:kw + 2 * Wo_p - 1:2, :] for kw in range(3)],
        axis=-1)                                              # (B, Ho_pad,   Wo_p, K)
    xe = xe.reshape(B, (Ho_pad + 1) * Wo_p, K)
    xo = xo.reshape(B, Ho_pad * Wo_p, K)

    # ---- fold conv bias + BN into weights / bias ---------------------------
    bn_scale = (gamma / jnp.sqrt(var + eps)).astype(jnp.float32)
    w = jnp.transpose(w_oihw, (2, 3, 1, 0)).astype(jnp.float32)   # (kh, kw, Cin, Cout)
    w = (w * bn_scale).reshape(3, K, Cout).astype(jnp.bfloat16)
    bias = (beta + (conv_bias - mean) * bn_scale).reshape(1, Cout).astype(jnp.float32)

    # ---- padded-tile VMEM budget, clamped to the device capacity -----------
    vmem_cap = _vmem_capacity_bytes()
    need = 2 * (  # x2 for double buffering
        _padded_block_bytes(((Ho_pad + 1) * Wo_p, K), jnp.bfloat16) +
        _padded_block_bytes((Ho_pad * Wo_p, K), jnp.bfloat16) +
        _padded_block_bytes((3, K, Cout), jnp.bfloat16) +
        _padded_block_bytes((1, Cout), jnp.float32) +
        _padded_block_bytes((M, Cout), out_dtype))
    vmem_limit = int(min(max(need + (8 << 20), 32 << 20), vmem_cap))

    kernel = functools.partial(_fused_conv_kernel, block_rows=tr, wo_p=Wo_p,
                               apply_gelu=apply_gelu, approx_gelu=approx_gelu)

    out = pl.pallas_call(
        kernel,
        out_shape=jax.ShapeDtypeStruct((B, Ho_pad * Wo_p, Cout), out_dtype),
        grid=(B, n_rt),
        in_specs=[
            # Per-image slabs, resident across the row-tile axis.
            pl.BlockSpec((None, (Ho_pad + 1) * Wo_p, K), lambda b, r: (b, 0, 0)),
            pl.BlockSpec((None, Ho_pad * Wo_p, K), lambda b, r: (b, 0, 0)),
            pl.BlockSpec((3, K, Cout), lambda b, r: (0, 0, 0)),
            pl.BlockSpec((1, Cout), lambda b, r: (0, 0)),
        ],
        out_specs=pl.BlockSpec((None, M, Cout), lambda b, r: (b, r, 0)),
        compiler_params=pltpu.CompilerParams(
            dimension_semantics=("parallel", "parallel"),
            vmem_limit_bytes=vmem_limit),
    )(xe, xo, w, bias)

    out = out.reshape(B, Ho_pad, Wo_p, Cout)
    if Ho_pad != Ho or Wo_p != Wo:
        out = out[:, :Ho, :Wo, :]
    return out, Ho, Wo


# --------------------------- Parameter setup -------------------------------- #

def init_stemconv_params(key, in_channels, out_channels, dtype=jnp.float32):
    c1 = out_channels // 2
    c2 = out_channels
    ks = jax.random.split(key, 12)

    def conv_w(k, cout, cin):
        fan_in = cin * 9
        bound = 1.0 / math.sqrt(fan_in)
        return jax.random.uniform(k, (cout, cin, 3, 3), dtype, -bound, bound)

    def vec(k, n, lo, hi):
        return jax.random.uniform(k, (n,), dtype, lo, hi)

    return dict(
        w1=conv_w(ks[0], c1, in_channels), b1=vec(ks[1], c1, -0.1, 0.1),
        g1=vec(ks[2], c1, 0.8, 1.2), be1=vec(ks[3], c1, -0.1, 0.1),
        m1=vec(ks[4], c1, -0.1, 0.1), v1=vec(ks[5], c1, 0.5, 1.5),
        w2=conv_w(ks[6], c2, c1), b2=vec(ks[7], c2, -0.1, 0.1),
        g2=vec(ks[8], c2, 0.8, 1.2), be2=vec(ks[9], c2, -0.1, 0.1),
        m2=vec(ks[10], c2, -0.1, 0.1), v2=vec(ks[11], c2, 0.5, 1.5),
    )


# ------------------------------ Forward ------------------------------------ #

def stem_conv_forward(x_nchw, p):
    """StemConv.forward: returns (x_flat (B, H*W, C_out), H, W)."""
    x = jnp.transpose(x_nchw, (0, 2, 3, 1))                    # NCHW -> NHWC
    y1, _, _ = conv3x3_s2_bn(x, p["w1"], p["b1"], p["g1"], p["be1"],
                             p["m1"], p["v1"], apply_gelu=True,
                             out_dtype=jnp.bfloat16)           # bf16 intermediate
    y2, H, W = conv3x3_s2_bn(y1, p["w2"], p["b2"], p["g2"], p["be2"],
                             p["m2"], p["v2"], apply_gelu=False,
                             out_dtype=jnp.float32)
    B, _, _, C = y2.shape
    # NHWC reshape == torch NCHW flatten(2).transpose(1,2): (B, H*W, C)
    return y2.reshape(B, H * W, C), H, W


# --------------------------- Reference (f32) -------------------------------- #

def _ref_conv_bn(x, w_oihw, b, g, be, m, v, *, gelu, eps=1e-5):
    w = jnp.transpose(w_oihw, (2, 3, 1, 0))                    # HWIO
    y = lax.conv_general_dilated(x, w, (2, 2), ((1, 1), (1, 1)),
                                 dimension_numbers=("NHWC", "HWIO", "NHWC"))
    y = y + b
    y = (y - m) * (g / jnp.sqrt(v + eps)) + be
    if gelu:
        y = 0.5 * y * (1.0 + lax.erf(y * _INV_SQRT2))
    return y


if __name__ == "__main__":
    key = jax.random.PRNGKey(0)
    k_x, k_p = jax.random.split(key)

    B, Cin, H, W = 2, 4, 16, 16
    out_channels = 32
    x = jax.random.normal(k_x, (B, Cin, H, W), jnp.float32)

    params = init_stemconv_params(k_p, Cin, out_channels)

    out, Ho, Wo = stem_conv_forward(x, params)
    out = jax.block_until_ready(out)

    assert out.shape == (B, Ho * Wo, out_channels), out.shape
    assert (Ho, Wo) == (H // 4, W // 4)
    assert bool(jnp.all(jnp.isfinite(out)))

    # Loose numerical check against a plain-XLA f32 reference (kernel is bf16).
    xh = jnp.transpose(x, (0, 2, 3, 1))
    r1 = _ref_conv_bn(xh, params["w1"], params["b1"], params["g1"],
                      params["be1"], params["m1"], params["v1"], gelu=True)
    r2 = _ref_conv_bn(r1, params["w2"], params["b2"], params["g2"],
                      params["be2"], params["m2"], params["v2"], gelu=False)
    ref = r2.reshape(B, Ho * Wo, out_channels)
    err = float(jnp.max(jnp.abs(out.astype(jnp.float32) - ref)))
    scale = float(jnp.max(jnp.abs(ref))) + 1e-6
    assert err <= 0.06 * scale + 2e-2, (err, scale)

    print("KERNEL_OK")
</pallas_src>

<mosaic_0001>
module attributes {stable_mosaic.version = 11 : i64} {
  func.func @_fused_conv_kernel(%arg0: i32, %arg1: i32, %arg2: memref<1x144x12xbf16, #tpu.memory_space<vmem>>, %arg3: memref<1x128x12xbf16, #tpu.memory_space<vmem>>, %arg4: memref<3x12x16xbf16, #tpu.memory_space<vmem>>, %arg5: memref<1x16xf32, #tpu.memory_space<vmem>>, %arg6: memref<1x128x16xbf16, #tpu.memory_space<vmem>>) attributes {dimension_semantics = [#tpu.dimension_semantics<parallel>, #tpu.dimension_semantics<parallel>], iteration_bounds = array<i64: 2, 1>, scalar_prefetch = 0 : i64, scratch_operands = 0 : i64, tpu.core_type = #tpu.core_type<tc>, window_params = [{transform_indices = @transform_0, window_bounds = array<i64: 1, 144, 12>}, {transform_indices = @transform_1, window_bounds = array<i64: 1, 128, 12>}, {pipeline_mode = #tpu.pipeline_mode<synchronous>, transform_indices = @transform_2, window_bounds = array<i64: 3, 12, 16>}, {pipeline_mode = #tpu.pipeline_mode<synchronous>, transform_indices = @transform_3, window_bounds = array<i64: 1, 16>}, {transform_indices = @transform_4, window_bounds = array<i64: 1, 128, 16>}]} {
    %c128_i32 = arith.constant 128 : i32
    %0 = arith.muli %arg1, %c128_i32 : i32
    %1 = tpu.assume_multiple %0, 16 : i32
    %c0 = arith.constant 0 : index
    %2 = arith.index_cast %1 : i32 to index
    %c0_0 = arith.constant 0 : index
    %3 = vector.load %arg2[%c0, %2, %c0_0] : memref<1x144x12xbf16, #tpu.memory_space<vmem>>, vector<1x128x12xbf16>
    %4 = vector.shape_cast %3 : vector<1x128x12xbf16> to vector<128x12xbf16>
    %c0_1 = arith.constant 0 : index
    %5 = arith.index_cast %1 : i32 to index
    %c0_2 = arith.constant 0 : index
    %6 = vector.load %arg3[%c0_1, %5, %c0_2] : memref<1x128x12xbf16, #tpu.memory_space<vmem>>, vector<1x128x12xbf16>
    %7 = vector.shape_cast %6 : vector<1x128x12xbf16> to vector<128x12xbf16>
    %c16_i32 = arith.constant 16 : i32
    %8 = arith.addi %1, %c16_i32 : i32
    %9 = tpu.assume_multiple %8, 16 : i32
    %c0_3 = arith.constant 0 : index
    %10 = arith.index_cast %9 : i32 to index
    %c0_4 = arith.constant 0 : index
    %11 = vector.load %arg2[%c0_3, %10, %c0_4] : memref<1x144x12xbf16, #tpu.memory_space<vmem>>, vector<1x128x12xbf16>
    %12 = vector.shape_cast %11 : vector<1x128x12xbf16> to vector<128x12xbf16>
    %c0_5 = arith.constant 0 : index
    %c0_6 = arith.constant 0 : index
    %c0_7 = arith.constant 0 : index
    %13 = vector.load %arg4[%c0_5, %c0_6, %c0_7] : memref<3x12x16xbf16, #tpu.memory_space<vmem>>, vector<1x12x16xbf16>
    %14 = vector.shape_cast %13 : vector<1x12x16xbf16> to vector<12x16xbf16>
    %cst = arith.constant dense<0.000000e+00> : vector<128x16xf32>
    %15 = tpu.matmul %4, %14, %cst {dimension_numbers = #tpu.dot_dimension_numbers<[1], [0], [0], [1], [0, 0, 1, 1], [], []>} : vector<128x12xbf16>, vector<12x16xbf16>, vector<128x16xf32> -> vector<128x16xf32>
    %c1 = arith.constant 1 : index
    %c0_8 = arith.constant 0 : index
    %c0_9 = arith.constant 0 : index
    %16 = vector.load %arg4[%c1, %c0_8, %c0_9] : memref<3x12x16xbf16, #tpu.memory_space<vmem>>, vector<1x12x16xbf16>
    %17 = vector.shape_cast %16 : vector<1x12x16xbf16> to vector<12x16xbf16>
    %cst_10 = arith.constant dense<0.000000e+00> : vector<128x16xf32>
    %18 = tpu.matmul %7, %17, %cst_10 {dimension_numbers = #tpu.dot_dimension_numbers<[1], [0], [0], [1], [0, 0, 1, 1], [], []>} : vector<128x12xbf16>, vector<12x16xbf16>, vector<128x16xf32> -> vector<128x16xf32>
    %19 = arith.addf %15, %18 : vector<128x16xf32>
    %c2 = arith.constant 2 : index
    %c0_11 = arith.constant 0 : index
    %c0_12 = arith.constant 0 : index
    %20 = vector.load %arg4[%c2, %c0_11, %c0_12] : memref<3x12x16xbf16, #tpu.memory_space<vmem>>, vector<1x12x16xbf16>
    %21 = vector.shape_cast %20 : vector<1x12x16xbf16> to vector<12x16xbf16>
    %cst_13 = arith.constant dense<0.000000e+00> : vector<128x16xf32>
    %22 = tpu.matmul %12, %21, %cst_13 {dimension_numbers = #tpu.dot_dimension_numbers<[1], [0], [0], [1], [0, 0, 1, 1], [], []>} : vector<128x12xbf16>, vector<12x16xbf16>, vector<128x16xf32> -> vector<128x16xf32>
    %23 = arith.addf %19, %22 : vector<128x16xf32>
    %c0_14 = arith.constant 0 : index
    %c0_15 = arith.constant 0 : index
    %24 = vector.load %arg5[%c0_14, %c0_15] : memref<1x16xf32, #tpu.memory_space<vmem>>, vector<1x16xf32>
    %25 = vector.broadcast %24 : vector<1x16xf32> to vector<128x16xf32>
    %26 = arith.addf %23, %25 : vector<128x16xf32>
    %cst_16 = arith.constant 5.000000e-01 : f32
    %27 = vector.broadcast %cst_16 : f32 to vector<128x16xf32>
    %28 = arith.mulf %27, %26 : vector<128x16xf32>
    %cst_17 = arith.constant 0.707106769 : f32
    %29 = vector.broadcast %cst_17 : f32 to vector<128x16xf32>
    %30 = arith.mulf %26, %29 : vector<128x16xf32>
    %31 = math.erf %30 : vector<128x16xf32>
    %cst_18 = arith.constant 1.000000e+00 : f32
    %32 = vector.broadcast %cst_18 : f32 to vector<128x16xf32>
    %33 = arith.addf %32, %31 : vector<128x16xf32>
    %34 = arith.mulf %28, %33 : vector<128x16xf32>
    %35 = arith.truncf %34 : vector<128x16xf32> to vector<128x16xbf16>
    %c0_19 = arith.constant 0 : index
    %c0_20 = arith.constant 0 : index
    %c0_21 = arith.constant 0 : index
    %36 = vector.load %arg6[%c0_19, %c0_20, %c0_21] : memref<1x128x16xbf16, #tpu.memory_space<vmem>>, vector<1x128x16xbf16>
    %37 = vector.shape_cast %36 : vector<1x128x16xbf16> to vector<128x16xbf16>
    %38 = vector.shape_cast %35 : vector<128x16xbf16> to vector<1x128x16xbf16>
    tpu.vector_store %arg6[%c0_19, %c0_20, %c0_21], %38 {strides = array<i32>} : memref<1x128x16xbf16, #tpu.memory_space<vmem>>, vector<1x128x16xbf16>,
    return
  }
  func.func @transform_0(%arg0: i32, %arg1: i32) -> (i32, i32, i32) {
    %c0_i32 = arith.constant 0 : i32
    %c0_i32_0 = arith.constant 0 : i32
    %c0_i32_1 = arith.constant 0 : i32
    return %arg0, %c0_i32, %c0_i32_0 : i32, i32, i32
  }
  func.func @transform_1(%arg0: i32, %arg1: i32) -> (i32, i32, i32) {
    %c0_i32 = arith.constant 0 : i32
    %c0_i32_0 = arith.constant 0 : i32
    %c0_i32_1 = arith.constant 0 : i32
    return %arg0, %c0_i32, %c0_i32_0 : i32, i32, i32
  }
  func.func @transform_2(%arg0: i32, %arg1: i32) -> (i32, i32, i32) {
    %c0_i32 = arith.constant 0 : i32
    %c0_i32_0 = arith.constant 0 : i32
    %c0_i32_1 = arith.constant 0 : i32
    %c0_i32_2 = arith.constant 0 : i32
    return %c0_i32, %c0_i32_0, %c0_i32_1 : i32, i32, i32
  }
  func.func @transform_3(%arg0: i32, %arg1: i32) -> (i32, i32) {
    %c0_i32 = arith.constant 0 : i32
    %c0_i32_0 = arith.constant 0 : i32
    %c0_i32_1 = arith.constant 0 : i32
    return %c0_i32, %c0_i32_0 : i32, i32
  }
  func.func @transform_4(%arg0: i32, %arg1: i32) -> (i32, i32, i32) {
    %c0_i32 = arith.constant 0 : i32
    %c0_i32_0 = arith.constant 0 : i32
    return %arg0, %arg1, %c0_i32 : i32, i32, i32
  }
}

</mosaic_0001>

<llo_original>
// kernel: tpu_custom_call.1
$region0: #{tpu_custom_call.1}
  #allocation0 [shape = 'u32[]', space=smem, size = 0x4, offset = 0x4, fixed_abs, tag = 'smem constant byte address 0x4 - core index']
  #allocation1 [shape = 'u32[72,128]{1,0:T(1,128)}', space=vmem, size = 0x9000, scoped, tag = 'internal scratch']
  %s0 = inlined_call_operand.vmem [shape: bf16[2,144,12], index: 0, kind: input, shape index: {}]
  %s1 = inlined_call_operand.vmem [shape: bf16[2,128,12], index: 1, kind: input, shape index: {}]
  %s2 = inlined_call_operand.vmem [shape: bf16[3,12,16], index: 2, kind: input, shape index: {}]
  %s3 = inlined_call_operand.vmem [shape: f32[1,16], index: 3, kind: input, shape index: {}]
  %s4 = inlined_call_operand.vmem [shape: bf16[2,128,16], index: 4, kind: output, shape index: {}]
  %s5 = sld [smem:[#allocation0]]
  $region49: #{tpu_custom_call.1} parent=0
    _
  %s7 = ssub.s32 1, %s5
  %s8 = scalar_select 0, %s7, %s5
  loop: start=0, step=1, limit=4
  $region2: #{tpu_custom_call.1} parent=0 // loop_pre_header
    _
  $region3: #{tpu_custom_call.1} parent=0 // loop_header
    %s10 = sphi 0, %s14
    %p11 = scmp.ge.s32.totalorder %s10, 4
    %s17 = sphi 0, %s29
    %s18 = sphi 0, %s25
    %s19 = sphi 0, %s17
    %s20 = sphi 0, %s18
    %s21 = sphi 0, %s19
    %s22 = sphi 0, %s20
    %s32 = sphi 0, %s34
    %s35 = sphi 0, %s32
    %s36 = sphi 0, %s35
    %s52 = sphi 0, %s36
    %s58 = sphi 0, %s60
    %s61 = sphi 0, %s58
    %s62 = sphi 0, %s61
    %s78 = sphi 0, %s62
    %s82 = sphi 0, %s82
    %s84 = sphi 0, %s82
    %s85 = sphi 0, %s84
    %s99 = sphi 0, %s85
    %s103 = sphi 0, %s103
    %s105 = sphi 0, %s103
    %s106 = sphi 0, %s105
    %s120 = sphi 0, %s106
    %s128 = sphi 0, %s130
    %s131 = sphi 0, %s128
    %s132 = sphi 0, %s131
    %s148 = sphi 0, %s132
  $region4: #{tpu_custom_call.1} parent=0 // loop_header_branch
    %13 = sbr.rel (%p11) target = $region8
  $region5: #{tpu_custom_call.1} parent=0 // loop_body
    %s15 = ssub.s32 %s10, 1
    %s16 = ssub.s32 %s10, 2
    %s23 = sadd.s32 1, %s18
    %p24 = scmp.ge.s32.totalorder %s23, 1
    %s25 = scalar_select %p24, 0, %s23
    %s26 = sadd.s32 1, %s17
    %s27 = scalar_select %p24, %s26, %s17
    %p28 = scmp.ge.s32.totalorder %s27, 2
    %s29 = scalar_select %p28, 0, %s27
    %s30 = ssub.s32 %s17, %s29
    %p31 = scmp.eq.s32.totalorder %s30, 0
    %s33 = sadd.s32 %s32, 1
    %s34 = scalar_select %p31, %s32, %s33
    %p37 = pneg %p31
    %p38 = scmp.eq.s32.totalorder %s10, 1
    %p39 = por %p37, %p38
    %p40 = scmp.ne.s32.totalorder %s32, %s35
    %p41 = scmp.eq.s32.totalorder %s10, 0
    %p42 = por %p40, %p41
    %p43 = scmp.ne.s32.totalorder %s32, %s35
    %p44 = scmp.eq.s32.totalorder %s15, 1
    %p45 = por %p43, %p44
    %p46 = scmp.ne.s32.totalorder %s35, %s36
    %p47 = scmp.eq.s32.totalorder %s15, 0
    %p48 = por %p46, %p47
    %p49 = scmp.ne.s32.totalorder %s35, %s36
    %p50 = scmp.eq.s32.totalorder %s16, 1
    %p51 = por %p49, %p50
    %p53 = scmp.ne.s32.totalorder %s36, %s52
    %p54 = scmp.eq.s32.totalorder %s16, 0
    %p55 = por %p53, %p54
    %s56 = ssub.s32 %s17, %s29
    %p57 = scmp.eq.s32.totalorder %s56, 0
    %s59 = sadd.s32 %s58, 1
    %s60 = scalar_select %p57, %s58, %s59
    %p63 = pneg %p57
    %p64 = scmp.eq.s32.totalorder %s10, 1
    %p65 = por %p63, %p64
    %p66 = scmp.ne.s32.totalorder %s58, %s61
    %p67 = scmp.eq.s32.totalorder %s10, 0
    %p68 = por %p66, %p67
    %p69 = scmp.ne.s32.totalorder %s58, %s61
    %p70 = scmp.eq.s32.totalorder %s15, 1
    %p71 = por %p69, %p70
    %p72 = scmp.ne.s32.totalorder %s61, %s62
    %p73 = scmp.eq.s32.totalorder %s15, 0
    %p74 = por %p72, %p73
    %p75 = scmp.ne.s32.totalorder %s61, %s62
    %p76 = scmp.eq.s32.totalorder %s16, 1
    %p77 = por %p75, %p76
    %p79 = scmp.ne.s32.totalorder %s62, %s78
    %p80 = scmp.eq.s32.totalorder %s16, 0
    %p81 = por %p79, %p80
    %s83 = sadd.s32 %s82, 1
    %p86 = scmp.eq.s32.totalorder %s10, 1
    %p87 = scmp.ne.s32.totalorder %s82, %s84
    %p88 = scmp.eq.s32.totalorder %s10, 0
    %p89 = por %p87, %p88
    %p90 = scmp.ne.s32.totalorder %s82, %s84
    %p91 = scmp.eq.s32.totalorder %s15, 1
    %p92 = por %p90, %p91
    %p93 = scmp.ne.s32.totalorder %s84, %s85
    %p94 = scmp.eq.s32.totalorder %s15, 0
    %p95 = por %p93, %p94
    %p96 = scmp.ne.s32.totalorder %s84, %s85
    %p97 = scmp.eq.s32.totalorder %s16, 1
    %p98 = por %p96, %p97
    %p100 = scmp.ne.s32.totalorder %s85, %s99
    %p101 = scmp.eq.s32.totalorder %s16, 0
    %p102 = por %p100, %p101
    %s104 = sadd.s32 %s103, 1
    %p107 = scmp.eq.s32.totalorder %s10, 1
    %p108 = scmp.ne.s32.totalorder %s103, %s105
    %p109 = scmp.eq.s32.totalorder %s10, 0
    %p110 = por %p108, %p109
    %p111 = scmp.ne.s32.totalorder %s103, %s105
    %p112 = scmp.eq.s32.totalorder %s15, 1
    %p113 = por %p111, %p112
    %p114 = scmp.ne.s32.totalorder %s105, %s106
    %p115 = scmp.eq.s32.totalorder %s15, 0
    %p116 = por %p114, %p115
    %p117 = scmp.ne.s32.totalorder %s105, %s106
    %p118 = scmp.eq.s32.totalorder %s16, 1
    %p119 = por %p117, %p118
    %p121 = scmp.ne.s32.totalorder %s106, %s120
    %p122 = scmp.eq.s32.totalorder %s16, 0
    %p123 = por %p121, %p122
    %s124 = ssub.s32 %s17, %s29
    %s125 = ssub.s32 %s18, %s25
    %s126 = sor.u32 %s124, %s125
    %p127 = scmp.eq.s32.totalorder %s126, 0
    %s129 = sadd.s32 %s128, 1
    %s130 = scalar_select %p127, %s128, %s129
    %p133 = pneg %p127
    %p134 = scmp.eq.s32.totalorder %s10, 1
    %p135 = por %p133, %p134
    %p136 = scmp.ne.s32.totalorder %s128, %s131
    %p137 = scmp.eq.s32.totalorder %s10, 0
    %p138 = por %p136, %p137
    %p139 = scmp.ne.s32.totalorder %s128, %s131
    %p140 = scmp.eq.s32.totalorder %s15, 1
    %p141 = por %p139, %p140
    %p142 = scmp.ne.s32.totalorder %s131, %s132
    %p143 = scmp.eq.s32.totalorder %s15, 0
    %p144 = por %p142, %p143
    %p145 = scmp.ne.s32.totalorder %s131, %s132
    %p146 = scmp.eq.s32.totalorder %s16, 1
    %p147 = por %p145, %p146
    %p149 = scmp.ne.s32.totalorder %s132, %s148
    %p150 = scmp.eq.s32.totalorder %s16, 0
    %p151 = por %p149, %p150
    %p152 = scmp.le.s32.totalorder 1, %s10
    %p153 = scmp.lt.s32.totalorder %s10, 3
    %p154 = pnand %p152, %p153
    %p155 = pneg %p154
    // Predicated region
    $region9: #{tpu_custom_call.1} parent=5 // pred_check
      _
    $region10: #{tpu_custom_call.1} parent=5 // pred_check_branch
      %157 = sbr.rel (%p154) target = $region12
    $region11: #{tpu_custom_call.1} parent=5 // pred_region
      %s158 = ssub.s32 %s10, 1
      // Predicated region
      $region13: #{tpu_custom_call.1} parent=11 // pred_check
        %p159 = pneg %p95
      $region14: #{tpu_custom_call.1} parent=11 // pred_check_branch
        %161 = sbr.rel (%p159) target = $region16
      $region15: #{tpu_custom_call.1} parent=11 // pred_region
        _
      $region16: #{tpu_custom_call.1} parent=11 // pred_fallthru
        _
      // Predicated region
      $region17: #{tpu_custom_call.1} parent=11 // pred_check
        %p162 = pneg %p116
      $region18: #{tpu_custom_call.1} parent=11 // pred_check_branch
        %164 = sbr.rel (%p162) target = $region20
      $region19: #{tpu_custom_call.1} parent=11 // pred_region
        _
      $region20: #{tpu_custom_call.1} parent=11 // pred_fallthru
        _
    $region12: #{tpu_custom_call.1} parent=5 // pred_fallthru
      _
    %p165 = scmp.lt.s32.totalorder %s10, 2
    // Predicated region
    $region21: #{tpu_custom_call.1} parent=5 // pred_check
      %p166 = pneg %p165
    $region22: #{tpu_custom_call.1} parent=5 // pred_check_branch
      %168 = sbr.rel (%p166) target = $region24
    $region23: #{tpu_custom_call.1} parent=5 // pred_region
      // Predicated region
      $region25: #{tpu_custom_call.1} parent=23 // pred_check
        %p169 = pneg %p42
      $region26: #{tpu_custom_call.1} parent=23 // pred_check_branch
        %171 = sbr.rel (%p169) target = $region28
      $region27: #{tpu_custom_call.1} parent=23 // pred_region
        %p172 = scmp.lt.s32.totalorder %s17, 1
        %s173 = scalar_select %p172, %s17, 1
        %s174 = smul.addr %s173, 18
        %s175 = smul.addr %s174, 4
        %s176 = scalar_lea.vmem %s0, %s175
      $region28: #{tpu_custom_call.1} parent=23 // pred_fallthru
        _
      // Predicated region
      $region29: #{tpu_custom_call.1} parent=23 // pred_check
        %p177 = pneg %p68
      $region30: #{tpu_custom_call.1} parent=23 // pred_check_branch
        %179 = sbr.rel (%p177) target = $region32
      $region31: #{tpu_custom_call.1} parent=23 // pred_region
        %p180 = scmp.lt.s32.totalorder %s17, 1
        %s181 = scalar_select %p180, %s17, 1
        %s182 = smul.addr %s181, 16
        %s183 = smul.addr %s182, 4
        %s184 = scalar_lea.vmem %s1, %s183
      $region32: #{tpu_custom_call.1} parent=23 // pred_fallthru
        _
    $region24: #{tpu_custom_call.1} parent=5 // pred_fallthru
      _
    %p185 = scmp.le.s32.totalorder 1, %s10
    %p186 = scmp.lt.s32.totalorder %s10, 3
    %p187 = pnand %p185, %p186
    %p188 = pneg %p187
    // Predicated region
    $region33: #{tpu_custom_call.1} parent=5 // pred_check
      _
    $region34: #{tpu_custom_call.1} parent=5 // pred_check_branch
      %190 = sbr.rel (%p187) target = $region36
    $region35: #{tpu_custom_call.1} parent=5 // pred_region
      %s191 = ssub.s32 %s10, 1
      %p192 = scmp.lt.s32.totalorder %s19, 1
      %s193 = scalar_select %p192, %s19, 1
      %s194 = smul.addr %s193, 18
      %s195 = smul.addr %s194, 4
      %s196 = scalar_lea.vmem %s0, %s195
      %p197 = pneg %p48
      %p198 = pneg %p45
      %p199 = scmp.lt.s32.totalorder %s19, 1
      %s200 = scalar_select %p199, %s19, 1
      %s201 = smul.addr %s200, 16
      %s202 = smul.addr %s201, 4
      %s203 = scalar_lea.vmem %s1, %s202
      %p204 = pneg %p74
      %p205 = pneg %p71
      %p206 = pneg %p95
      %p207 = pneg %p92
      %p208 = pneg %p116
      %p209 = pneg %p113
      %p210 = pneg %p144
      %p211 = pneg %p141
      %s212 = smul.u32 16, %s20
      %p213 = scmp.lt.s32.totalorder %s19, 1
      %s214 = scalar_select %p213, %s19, 1
      %p215 = scmp.lt.s32.totalorder %s212, 15
      %s216 = scalar_select %p215, %s212, 15
      %s217 = smul.addr %s214, 16
      %s218 = sadd.s32 %s216, %s217
      %s219 = smul.addr %s218, 4
      %s220 = scalar_lea.vmem %s4, %s219
      %p221 = scmp.lt.s32.totalorder %s19, 1
      %s222 = scalar_select %p221, %s19, 1
      %s223 = smul.addr %s222, 18
      %s224 = smul.addr %s223, 4
      %s225 = scalar_lea.vmem %s0, %s224
      %p226 = scmp.lt.s32.totalorder %s19, 1
      %s227 = scalar_select %p226, %s19, 1
      %s228 = smul.addr %s227, 16
      %s229 = smul.addr %s228, 4
      %s230 = scalar_lea.vmem %s1, %s229
      %s231 = smul.u32 16, %s20
      %p232 = scmp.lt.s32.totalorder %s19, 1
      %s233 = scalar_select %p232, %s19, 1
      %p234 = scmp.lt.s32.totalorder %s231, 15
      %s235 = scalar_select %p234, %s231, 15
      %s236 = smul.addr %s233, 16
      %s237 = sadd.s32 %s235, %s236
      %s238 = smul.addr %s237, 4
      %s239 = scalar_lea.vmem %s4, %s238
      %s240 = smul.u32 16, %s20
      %s242 = smul.u32 %s20, 128
      %s243 = sshra.s32 %s242, 3
      %s244 = sand.u32 %s242, 7
      %s245 = smul.addr %s243, 4
      %s246 = scalar_lea.vmem %s225, %s245
      %v247 = vld [vmem:[%s246] sm:$0xf]
      %v248 = vld [vmem:[%s246 + $0x4] sm:$0xf]
      %v249 = vld [vmem:[%s246 + $0x8] sm:$0xf]
      %v250 = vld [vmem:[%s246 + $0xc] sm:$0xf]
      %v251 = vld [vmem:[%s246 + $0x10] sm:$0xf]
      %v252 = vld [vmem:[%s246 + $0x14] sm:$0xf]
      %v253 = vld [vmem:[%s246 + $0x18] sm:$0xf]
      %v254 = vld [vmem:[%s246 + $0x1c] sm:$0xf]
      %v255 = vld [vmem:[%s246 + $0x20] sm:$0xf]
      %v256 = vld [vmem:[%s246 + $0x24] sm:$0xf]
      %v257 = vld [vmem:[%s246 + $0x28] sm:$0xf]
      %v258 = vld [vmem:[%s246 + $0x2c] sm:$0xf]
      %v259 = vld [vmem:[%s246 + $0x30] sm:$0xf]
      %v260 = vld [vmem:[%s246 + $0x34] sm:$0xf]
      %v261 = vld [vmem:[%s246 + $0x38] sm:$0xf]
      %v262 = vld [vmem:[%s246 + $0x3c] sm:$0xf]
      %s263 = smul.addr %s243, 4
      %s264 = scalar_lea.vmem %s230, %s263
      %v265 = vld [vmem:[%s264] sm:$0xf]
      %v266 = vld [vmem:[%s264 + $0x4] sm:$0xf]
      %v267 = vld [vmem:[%s264 + $0x8] sm:$0xf]
      %v268 = vld [vmem:[%s264 + $0xc] sm:$0xf]
      %v269 = vld [vmem:[%s264 + $0x10] sm:$0xf]
      %v270 = vld [vmem:[%s264 + $0x14] sm:$0xf]
      %v271 = vld [vmem:[%s264 + $0x18] sm:$0xf]
      %v272 = vld [vmem:[%s264 + $0x1c] sm:$0xf]
      %v273 = vld [vmem:[%s264 + $0x20] sm:$0xf]
      %v274 = vld [vmem:[%s264 + $0x24] sm:$0xf]
      %v275 = vld [vmem:[%s264 + $0x28] sm:$0xf]
      %v276 = vld [vmem:[%s264 + $0x2c] sm:$0xf]
      %v277 = vld [vmem:[%s264 + $0x30] sm:$0xf]
      %v278 = vld [vmem:[%s264 + $0x34] sm:$0xf]
      %v279 = vld [vmem:[%s264 + $0x38] sm:$0xf]
      %v280 = vld [vmem:[%s264 + $0x3c] sm:$0xf]
      %s281 = sadd.s32 %s242, 16
      %s282 = sshra.s32 %s281, 3
      %s283 = sand.u32 %s281, 7
      %s284 = smul.addr %s282, 4
      %s285 = scalar_lea.vmem %s225, %s284
      %v286 = vld [vmem:[%s285] sm:$0xf]
      %v287 = vld [vmem:[%s285 + $0x4] sm:$0xf]
      %v288 = vld [vmem:[%s285 + $0x8] sm:$0xf]
      %v289 = vld [vmem:[%s285 + $0xc] sm:$0xf]
      %v290 = vld [vmem:[%s285 + $0x10] sm:$0xf]
      %v291 = vld [vmem:[%s285 + $0x14] sm:$0xf]
      %v292 = vld [vmem:[%s285 + $0x18] sm:$0xf]
      %v293 = vld [vmem:[%s285 + $0x1c] sm:$0xf]
      %v294 = vld [vmem:[%s285 + $0x20] sm:$0xf]
      %v295 = vld [vmem:[%s285 + $0x24] sm:$0xf]
      %v296 = vld [vmem:[%s285 + $0x28] sm:$0xf]
      %v297 = vld [vmem:[%s285 + $0x2c] sm:$0xf]
      %v298 = vld [vmem:[%s285 + $0x30] sm:$0xf]
      %v299 = vld [vmem:[%s285 + $0x34] sm:$0xf]
      %v300 = vld [vmem:[%s285 + $0x38] sm:$0xf]
      %v301 = vld [vmem:[%s285 + $0x3c] sm:$0xf]
      %v302 = vld [vmem:[%s2] sm:$0xf]
      %v303 = vld [vmem:[%s2 + $0x4] sm:$0x3]
      %s304 = scalar_lea.vmem %s2, 8
      %v305 = vld [vmem:[%s304] sm:$0xf]
      %v306 = vld [vmem:[%s304 + $0x4] sm:$0x3]
      %v323 = vunpack.c.l.b16 %v265
      %v324 = vunpack.c.l.b16 %v266
      %v325 = vunpack.c.l.b16 %v267
      %v326 = vunpack.c.l.b16 %v268
      %v327 = vunpack.c.l.b16 %v269
      %v328 = vunpack.c.l.b16 %v270
      %v329 = vunpack.c.l.b16 %v271
      %v330 = vunpack.c.l.b16 %v272
      %v331 = vunpack.c.l.b16 %v273
      %v332 = vunpack.c.l.b16 %v274
      %v333 = vunpack.c.l.b16 %v275
      %v334 = vunpack.c.l.b16 %v276
      %v335 = vunpack.c.l.b16 %v277
      %v336 = vunpack.c.l.b16 %v278
      %v337 = vunpack.c.l.b16 %v279
      %v338 = vunpack.c.l.b16 %v280
      %v339 = vpack.c.b16 %v324, %v323
      %v340 = vpack.c.b16 %v326, %v325
      %v341 = vpack.c.b16 %v328, %v327
      %v342 = vpack.c.b16 %v330, %v329
      %v343 = vpack.c.b16 %v332, %v331
      %v344 = vpack.c.b16 %v334, %v333
      %v345 = vpack.c.b16 %v336, %v335
      %v346 = vpack.c.b16 %v338, %v337
      %v349 = vunpack.c.l.b16 %v305
      %v350 = vunpack.c.l.b16 %v306
      %v351 = vpack.c.b16 %v350, %v349
      %vm352 = vcmask 97280
      %v354 = vsel %vm352, %v339, 0
      %v357 = vsel %vm352, %v340, 0
      %v360 = vsel %vm352, %v341, 0
      %v363 = vsel %vm352, %v342, 0
      %v366 = vsel %vm352, %v343, 0
      %v369 = vsel %vm352, %v344, 0
      %v372 = vsel %vm352, %v345, 0
      %v375 = vsel %vm352, %v346, 0
      %vm377 = vcmask 1045504
      %v379 = vsel %vm377, %v351, 0
      %381 = vmatpush.bf16.msra.mxu0 0
      %382 = vmatpush.bf16.msra.mxu0 0
      %383 = vmatpush.bf16.msra.mxu0 0
      %384 = vmatpush.bf16.msra.mxu0 0
      %385 = vmatpush.bf16.msra.mxu0 0
      %386 = vmatpush.bf16.msra.mxu0 0
      %387 = vmatpush.bf16.msra.mxu0 0
      %388 = vmatpush.bf16.msra.mxu0 %v379
      %389 = vmatmul.bf16.gmra.mxu0 %v354
      %v390 = vpop.f32.mrf.mxu0
      %v391 = vadd.f32 0.0, %v390
      %v392 = vpop.f32.mrf.mxu0
      %v393 = vadd.f32 0.0, %v392
      %394 = vmatmul.bf16.gmra.mxu0 %v357
      %v395 = vpop.f32.mrf.mxu0
      %v396 = vadd.f32 0.0, %v395
      %v397 = vpop.f32.mrf.mxu0
      %v398 = vadd.f32 0.0, %v397
      %399 = vmatmul.bf16.gmra.mxu0 %v360
      %v400 = vpop.f32.mrf.mxu0
      %v401 = vadd.f32 0.0, %v400
      %v402 = vpop.f32.mrf.mxu0
      %v403 = vadd.f32 0.0, %v402
      %404 = vmatmul.bf16.gmra.mxu0 %v363
      %v405 = vpop.f32.mrf.mxu0
      %v406 = vadd.f32 0.0, %v405
      %v407 = vpop.f32.mrf.mxu0
      %v408 = vadd.f32 0.0, %v407
      %409 = vmatmul.bf16.gmra.mxu0 %v366
      %v410 = vpop.f32.mrf.mxu0
      %v411 = vadd.f32 0.0, %v410
      %v412 = vpop.f32.mrf.mxu0
      %v413 = vadd.f32 0.0, %v412
      %414 = vmatmul.bf16.gmra.mxu0 %v369
      %v415 = vpop.f32.mrf.mxu0
      %v416 = vadd.f32 0.0, %v415
      %v417 = vpop.f32.mrf.mxu0
      %v418 = vadd.f32 0.0, %v417
      %419 = vmatmul.bf16.gmra.mxu0 %v372
      %v420 = vpop.f32.mrf.mxu0
      %v421 = vadd.f32 0.0, %v420
      %v422 = vpop.f32.mrf.mxu0
      %v423 = vadd.f32 0.0, %v422
      %424 = vmatmul.bf16.gmra.mxu0 %v375
      %v425 = vpop.f32.mrf.mxu0
      %v426 = vadd.f32 0.0, %v425
      %v427 = vpop.f32.mrf.mxu0
      %v428 = vadd.f32 0.0, %v427
      %429 = vdwg.mxu0
      %v446 = vunpack.c.l.b16 %v247
      %v447 = vunpack.c.l.b16 %v248
      %v448 = vunpack.c.l.b16 %v249
      %v449 = vunpack.c.l.b16 %v250
      %v450 = vunpack.c.l.b16 %v251
      %v451 = vunpack.c.l.b16 %v252
      %v452 = vunpack.c.l.b16 %v253
      %v453 = vunpack.c.l.b16 %v254
      %v454 = vunpack.c.l.b16 %v255
      %v455 = vunpack.c.l.b16 %v256
      %v456 = vunpack.c.l.b16 %v257
      %v457 = vunpack.c.l.b16 %v258
      %v458 = vunpack.c.l.b16 %v259
      %v459 = vunpack.c.l.b16 %v260
      %v460 = vunpack.c.l.b16 %v261
      %v461 = vunpack.c.l.b16 %v262
      %v462 = vpack.c.b16 %v447, %v446
      %v463 = vpack.c.b16 %v449, %v448
      %v464 = vpack.c.b16 %v451, %v450
      %v465 = vpack.c.b16 %v453, %v452
      %v466 = vpack.c.b16 %v455, %v454
      %v467 = vpack.c.b16 %v457, %v456
      %v468 = vpack.c.b16 %v459, %v458
      %v469 = vpack.c.b16 %v461, %v460
      %v472 = vunpack.c.l.b16 %v302
      %v473 = vunpack.c.l.b16 %v303
      %v474 = vpack.c.b16 %v473, %v472
      %v476 = vsel %vm352, %v462, 0
      %v479 = vsel %vm352, %v463, 0
      %v482 = vsel %vm352, %v464, 0
      %v485 = vsel %vm352, %v465, 0
      %v488 = vsel %vm352, %v466, 0
      %v491 = vsel %vm352, %v467, 0
      %v494 = vsel %vm352, %v468, 0
      %v497 = vsel %vm352, %v469, 0
      %v500 = vsel %vm377, %v474, 0
      %502 = vmatpush.bf16.msra.mxu0 0
      %503 = vmatpush.bf16.msra.mxu0 0
      %504 = vmatpush.bf16.msra.mxu0 0
      %505 = vmatpush.bf16.msra.mxu0 0
      %506 = vmatpush.bf16.msra.mxu0 0
      %507 = vmatpush.bf16.msra.mxu0 0
      %508 = vmatpush.bf16.msra.mxu0 0
      %509 = vmatpush.bf16.msra.mxu0 %v500
      %510 = vmatmul.bf16.gmra.mxu0 %v476
      %v511 = vpop.f32.mrf.mxu0
      %v512 = vadd.f32 %v391, %v511
      %v513 = vpop.f32.mrf.mxu0
      %v514 = vadd.f32 %v393, %v513
      %515 = vmatmul.bf16.gmra.mxu0 %v479
      %v516 = vpop.f32.mrf.mxu0
      %v517 = vadd.f32 %v396, %v516
      %v518 = vpop.f32.mrf.mxu0
      %v519 = vadd.f32 %v398, %v518
      %520 = vmatmul.bf16.gmra.mxu0 %v482
      %v521 = vpop.f32.mrf.mxu0
      %v522 = vadd.f32 %v401, %v521
      %v523 = vpop.f32.mrf.mxu0
      %v524 = vadd.f32 %v403, %v523
      %525 = vmatmul.bf16.gmra.mxu0 %v485
      %v526 = vpop.f32.mrf.mxu0
      %v527 = vadd.f32 %v406, %v526
      %v528 = vpop.f32.mrf.mxu0
      %v529 = vadd.f32 %v408, %v528
      %530 = vmatmul.bf16.gmra.mxu0 %v488
      %v531 = vpop.f32.mrf.mxu0
      %v532 = vadd.f32 %v411, %v531
      %v533 = vpop.f32.mrf.mxu0
      %v534 = vadd.f32 %v413, %v533
      %535 = vmatmul.bf16.gmra.mxu0 %v491
      %v536 = vpop.f32.mrf.mxu0
      %v537 = vadd.f32 %v416, %v536
      %v538 = vpop.f32.mrf.mxu0
      %v539 = vadd.f32 %v418, %v538
      %540 = vmatmul.bf16.gmra.mxu0 %v494
      %v541 = vpop.f32.mrf.mxu0
      %v542 = vadd.f32 %v421, %v541
      %v543 = vpop.f32.mrf.mxu0
      %v544 = vadd.f32 %v423, %v543
      %545 = vmatmul.bf16.gmra.mxu0 %v497
      %v546 = vpop.f32.mrf.mxu0
      %v547 = vadd.f32 %v426, %v546
      %v548 = vpop.f32.mrf.mxu0
      %v549 = vadd.f32 %v428, %v548
      %550 = vdwg.mxu0
      %s551 = scalar_lea.vmem %s2, 16
      %v552 = vld [vmem:[%s551] sm:$0xf]
      %v553 = vld [vmem:[%s551 + $0x4] sm:$0x3]
      %v570 = vunpack.c.l.b16 %v286
      %v571 = vunpack.c.l.b16 %v287
      %v572 = vunpack.c.l.b16 %v288
      %v573 = vunpack.c.l.b16 %v289
      %v574 = vunpack.c.l.b16 %v290
      %v575 = vunpack.c.l.b16 %v291
      %v576 = vunpack.c.l.b16 %v292
      %v577 = vunpack.c.l.b16 %v293
      %v578 = vunpack.c.l.b16 %v294
      %v579 = vunpack.c.l.b16 %v295
      %v580 = vunpack.c.l.b16 %v296
      %v581 = vunpack.c.l.b16 %v297
      %v582 = vunpack.c.l.b16 %v298
      %v583 = vunpack.c.l.b16 %v299
      %v584 = vunpack.c.l.b16 %v300
      %v585 = vunpack.c.l.b16 %v301
      %v586 = vpack.c.b16 %v571, %v570
      %v587 = vpack.c.b16 %v573, %v572
      %v588 = vpack.c.b16 %v575, %v574
      %v589 = vpack.c.b16 %v577, %v576
      %v590 = vpack.c.b16 %v579, %v578
      %v591 = vpack.c.b16 %v581, %v580
      %v592 = vpack.c.b16 %v583, %v582
      %v593 = vpack.c.b16 %v585, %v584
      %v596 = vunpack.c.l.b16 %v552
      %v597 = vunpack.c.l.b16 %v553
      %v598 = vpack.c.b16 %v597, %v596
      %v600 = vsel %vm352, %v586, 0
      %v603 = vsel %vm352, %v587, 0
      %v606 = vsel %vm352, %v588, 0
      %v609 = vsel %vm352, %v589, 0
      %v612 = vsel %vm352, %v590, 0
      %v615 = vsel %vm352, %v591, 0
      %v618 = vsel %vm352, %v592, 0
      %v621 = vsel %vm352, %v593, 0
      %v624 = vsel %vm377, %v598, 0
      %626 = vmatpush.bf16.msra.mxu0 0
      %627 = vmatpush.bf16.msra.mxu0 0
      %628 = vmatpush.bf16.msra.mxu0 0
      %629 = vmatpush.bf16.msra.mxu0 0
      %630 = vmatpush.bf16.msra.mxu0 0
      %631 = vmatpush.bf16.msra.mxu0 0
      %632 = vmatpush.bf16.msra.mxu0 0
      %633 = vmatpush.bf16.msra.mxu0 %v624
      %634 = vmatmul.bf16.gmra.mxu0 %v600
      %v635 = vpop.f32.mrf.mxu0
      %v636 = vadd.f32 0.0, %v635
      %v637 = vpop.f32.mrf.mxu0
      %v638 = vadd.f32 0.0, %v637
      %639 = vmatmul.bf16.gmra.mxu0 %v603
      %v640 = vpop.f32.mrf.mxu0
      %v641 = vadd.f32 0.0, %v640
      %v642 = vpop.f32.mrf.mxu0
      %v643 = vadd.f32 0.0, %v642
      %644 = vmatmul.bf16.gmra.mxu0 %v606
      %v645 = vpop.f32.mrf.mxu0
      %v646 = vadd.f32 0.0, %v645
      %v647 = vpop.f32.mrf.mxu0
      %v648 = vadd.f32 0.0, %v647
      %649 = vmatmul.bf16.gmra.mxu0 %v609
      %v650 = vpop.f32.mrf.mxu0
      %v651 = vadd.f32 0.0, %v650
      %v652 = vpop.f32.mrf.mxu0
      %v653 = vadd.f32 0.0, %v652
      %654 = vmatmul.bf16.gmra.mxu0 %v612
      %v655 = vpop.f32.mrf.mxu0
      %v656 = vadd.f32 0.0, %v655
      %v657 = vpop.f32.mrf.mxu0
      %v658 = vadd.f32 0.0, %v657
      %659 = vmatmul.bf16.gmra.mxu0 %v615
      %v660 = vpop.f32.mrf.mxu0
      %v661 = vadd.f32 0.0, %v660
      %v662 = vpop.f32.mrf.mxu0
      %v663 = vadd.f32 0.0, %v662
      %664 = vmatmul.bf16.gmra.mxu0 %v618
      %v665 = vpop.f32.mrf.mxu0
      %v666 = vadd.f32 0.0, %v665
      %v667 = vpop.f32.mrf.mxu0
      %v668 = vadd.f32 0.0, %v667
      %669 = vmatmul.bf16.gmra.mxu0 %v621
      %v670 = vpop.f32.mrf.mxu0
      %v671 = vadd.f32 0.0, %v670
      %v672 = vpop.f32.mrf.mxu0
      %v673 = vadd.f32 0.0, %v672
      %674 = vdwg.mxu0
      %v675 = vadd.f32 %v512, %v636
      %v676 = vadd.f32 %v514, %v638
      %v677 = vadd.f32 %v517, %v641
      %v678 = vadd.f32 %v519, %v643
      %v679 = vadd.f32 %v522, %v646
      %v680 = vadd.f32 %v524, %v648
      %v681 = vadd.f32 %v527, %v651
      %v682 = vadd.f32 %v529, %v653
      %v683 = vadd.f32 %v532, %v656
      %v684 = vadd.f32 %v534, %v658
      %v685 = vadd.f32 %v537, %v661
      %v686 = vadd.f32 %v539, %v663
      %v687 = vadd.f32 %v542, %v666
      %v688 = vadd.f32 %v544, %v668
      %v689 = vadd.f32 %v547, %v671
      %v690 = vadd.f32 %v549, %v673
      %v691 = vld [vmem:[%s3] sm:$0x1]
      %v693 = vperm.slane %v691, 0
      %v695 = vadd.f32 %v675, %v693
      %v696 = vadd.f32 %v676, %v693
      %v697 = vadd.f32 %v677, %v693
      %v698 = vadd.f32 %v678, %v693
      %v699 = vadd.f32 %v679, %v693
      %v700 = vadd.f32 %v680, %v693
      %v701 = vadd.f32 %v681, %v693
      %v702 = vadd.f32 %v682, %v693
      %v703 = vadd.f32 %v683, %v693
      %v704 = vadd.f32 %v684, %v693
      %v705 = vadd.f32 %v685, %v693
      %v706 = vadd.f32 %v686, %v693
      %v707 = vadd.f32 %v687, %v693
      %v708 = vadd.f32 %v688, %v693
      %v709 = vadd.f32 %v689, %v693
      %v710 = vadd.f32 %v690, %v693
      %v711 = vmul.f32 %v695, 0.5
      %v712 = vmul.f32 %v696, 0.5
      %v713 = vmul.f32 %v697, 0.5
      %v714 = vmul.f32 %v698, 0.5
      %v715 = vmul.f32 %v699, 0.5
      %v716 = vmul.f32 %v700, 0.5
      %v717 = vmul.f32 %v701, 0.5
      %v718 = vmul.f32 %v702, 0.5
      %v719 = vmul.f32 %v703, 0.5
      %v720 = vmul.f32 %v704, 0.5
      %v721 = vmul.f32 %v705, 0.5
      %v722 = vmul.f32 %v706, 0.5
      %v723 = vmul.f32 %v707, 0.5
      %v724 = vmul.f32 %v708, 0.5
      %v725 = vmul.f32 %v709, 0.5
      %v726 = vmul.f32 %v710, 0.5
      %v727 = vmul.f32 %v695, 0.70710677
      %v728 = vmul.f32 %v696, 0.70710677
      %v729 = vmul.f32 %v697, 0.70710677
      %v730 = vmul.f32 %v698, 0.70710677
      %v731 = vmul.f32 %v699, 0.70710677
      %v732 = vmul.f32 %v700, 0.70710677
      %v733 = vmul.f32 %v701, 0.70710677
      %v734 = vmul.f32 %v702, 0.70710677
      %v735 = vmul.f32 %v703, 0.70710677
      %v736 = vmul.f32 %v704, 0.70710677
      %v737 = vmul.f32 %v705, 0.70710677
      %v738 = vmul.f32 %v706, 0.70710677
      %v739 = vmul.f32 %v707, 0.70710677
      %v740 = vmul.f32 %v708, 0.70710677
      %v741 = vmul.f32 %v709, 0.70710677
      %v742 = vmul.f32 %v710, 0.70710677
      %v743 = vmul.f32 %v727, %v727
      %v744 = vmin.f32 16.0, %v743
      %v745 = vmul.f32 %v744, 2.1237322e-06
      %v746 = vadd.f32 %v745, 0.00028619796
      %v747 = vmul.f32 %v744, %v746
      %v748 = vadd.f32 %v747, 0.0036580483
      %v749 = vmul.f32 %v744, %v748
      %v750 = vadd.f32 %v749, 0.05243302
      %v751 = vmul.f32 %v744, %v750
      %v752 = vadd.f32 %v751, 0.18741608
      %v753 = vmul.f32 %v744, %v752
      %v754 = vadd.f32 %v753, 1.1283791
      %v755 = vmul.f32 %v727, %v754
      %v756 = vmul.f32 %v744, 3.8918573e-05
      %v757 = vadd.f32 %v756, 0.001143296
      %v758 = vmul.f32 %v744, %v757
      %v759 = vadd.f32 %v758, 0.014752088
      %v760 = vmul.f32 %v744, %v759
      %v761 = vadd.f32 %v760, 0.112945676
      %v762 = vmul.f32 %v744, %v761
      %v763 = vadd.f32 %v762, 0.4994258
      %v764 = vmul.f32 %v744, %v763
      %v765 = vadd.f32 %v764, 1.0
      %v766 = vrcp.pop %v765
      %v767 = vmul.f32 %v765, %v766
      %v768 = vsub.f32 1.0, %v767
      %v769 = vmul.f32 %v766, %v768
      %v770 = vadd.f32 %v766, %v769
      %vm771 = vweird.f32 %v765
      %vm772 = vweird.f32 %v766
      %vm773 = vmor %vm771, %vm772
      %v774 = vsel %vm773, %v766, %v770
      %v775 = vand.u32 2147483647, %v765
      %vm776 = vcmp.eq.f32.partialorder %v775, 8.507059e+37
      %v777 = vand.u32 %v765, 2147483648
      %v778 = vor.u32 1.1754944e-38, %v777
      %v779 = vsel %vm776, %v778, %v774
      %v780 = vmul.f32 %v755, %v779
      %v781 = vmin.f32 %v780, 1.0
      %v782 = vmax.f32 %v781, -1.0
      %v783 = vmul.f32 %v728, %v728
      %v784 = vmin.f32 16.0, %v783
      %v785 = vmul.f32 %v784, 2.1237322e-06
      %v786 = vadd.f32 %v785, 0.00028619796
      %v787 = vmul.f32 %v784, %v786
      %v788 = vadd.f32 %v787, 0.0036580483
      %v789 = vmul.f32 %v784, %v788
      %v790 = vadd.f32 %v789, 0.05243302
      %v791 = vmul.f32 %v784, %v790
      %v792 = vadd.f32 %v791, 0.18741608
      %v793 = vmul.f32 %v784, %v792
      %v794 = vadd.f32 %v793, 1.1283791
      %v795 = vmul.f32 %v728, %v794
      %v796 = vmul.f32 %v784, 3.8918573e-05
      %v797 = vadd.f32 %v796, 0.001143296
      %v798 = vmul.f32 %v784, %v797
      %v799 = vadd.f32 %v798, 0.014752088
      %v800 = vmul.f32 %v784, %v799
      %v801 = vadd.f32 %v800, 0.112945676
      %v802 = vmul.f32 %v784, %v801
      %v803 = vadd.f32 %v802, 0.4994258
      %v804 = vmul.f32 %v784, %v803
      %v805 = vadd.f32 %v804, 1.0
      %v806 = vrcp.pop %v805
      %v807 = vmul.f32 %v805, %v806
      %v808 = vsub.f32 1.0, %v807
      %v809 = vmul.f32 %v806, %v808
      %v810 = vadd.f32 %v806, %v809
      %vm811 = vweird.f32 %v805
      %vm812 = vweird.f32 %v806
      %vm813 = vmor %vm811, %vm812
      %v814 = vsel %vm813, %v806, %v810
      %v815 = vand.u32 2147483647, %v805
      %vm816 = vcmp.eq.f32.partialorder %v815, 8.507059e+37
      %v817 = vand.u32 %v805, 2147483648
      %v818 = vor.u32 1.1754944e-38, %v817
      %v819 = vsel %vm816, %v818, %v814
      %v820 = vmul.f32 %v795, %v819
      %v821 = vmin.f32 %v820, 1.0
      %v822 = vmax.f32 %v821, -1.0
      %v823 = vmul.f32 %v729, %v729
      %v824 = vmin.f32 16.0, %v823
      %v825 = vmul.f32 %v824, 2.1237322e-06
      %v826 = vadd.f32 %v825, 0.00028619796
      %v827 = vmul.f32 %v824, %v826
      %v828 = vadd.f32 %v827, 0.0036580483
      %v829 = vmul.f32 %v824, %v828
      %v830 = vadd.f32 %v829, 0.05243302
      %v831 = vmul.f32 %v824, %v830
      %v832 = vadd.f32 %v831, 0.18741608
      %v833 = vmul.f32 %v824, %v832
      %v834 = vadd.f32 %v833, 1.1283791
      %v835 = vmul.f32 %v729, %v834
      %v836 = vmul.f32 %v824, 3.8918573e-05
      %v837 = vadd.f32 %v836, 0.001143296
      %v838 = vmul.f32 %v824, %v837
      %v839 = vadd.f32 %v838, 0.014752088
      %v840 = vmul.f32 %v824, %v839
      %v841 = vadd.f32 %v840, 0.112945676
      %v842 = vmul.f32 %v824, %v841
      %v843 = vadd.f32 %v842, 0.4994258
      %v844 = vmul.f32 %v824, %v843
      %v845 = vadd.f32 %v844, 1.0
      %v846 = vrcp.pop %v845
      %v847 = vmul.f32 %v845, %v846
      %v848 = vsub.f32 1.0, %v847
      %v849 = vmul.f32 %v846, %v848
      %v850 = vadd.f32 %v846, %v849
      %vm851 = vweird.f32 %v845
      %vm852 = vweird.f32 %v846
      %vm853 = vmor %vm851, %vm852
      %v854 = vsel %vm853, %v846, %v850
      %v855 = vand.u32 2147483647, %v845
      %vm856 = vcmp.eq.f32.partialorder %v855, 8.507059e+37
      %v857 = vand.u32 %v845, 2147483648
      %v858 = vor.u32 1.1754944e-38, %v857
      %v859 = vsel %vm856, %v858, %v854
      %v860 = vmul.f32 %v835, %v859
      %v861 = vmin.f32 %v860, 1.0
      %v862 = vmax.f32 %v861, -1.0
      %v863 = vmul.f32 %v730, %v730
      %v864 = vmin.f32 16.0, %v863
      %v865 = vmul.f32 %v864, 2.1237322e-06
      %v866 = vadd.f32 %v865, 0.00028619796
      %v867 = vmul.f32 %v864, %v866
      %v868 = vadd.f32 %v867, 0.0036580483
      %v869 = vmul.f32 %v864, %v868
      %v870 = vadd.f32 %v869, 0.05243302
      %v871 = vmul.f32 %v864, %v870
      %v872 = vadd.f32 %v871, 0.18741608
      %v873 = vmul.f32 %v864, %v872
      %v874 = vadd.f32 %v873, 1.1283791
      %v875 = vmul.f32 %v730, %v874
      %v876 = vmul.f32 %v864, 3.8918573e-05
      %v877 = vadd.f32 %v876, 0.001143296
      %v878 = vmul.f32 %v864, %v877
      %v879 = vadd.f32 %v878, 0.014752088
      %v880 = vmul.f32 %v864, %v879
      %v881 = vadd.f32 %v880, 0.112945676
      %v882 = vmul.f32 %v864, %v881
      %v883 = vadd.f32 %v882, 0.4994258
      %v884 = vmul.f32 %v864, %v883
      %v885 = vadd.f32 %v884, 1.0
      %v886 = vrcp.pop %v885
      %v887 = vmul.f32 %v885, %v886
      %v888 = vsub.f32 1.0, %v887
      %v889 = vmul.f32 %v886, %v888
      %v890 = vadd.f32 %v886, %v889
      %vm891 = vweird.f32 %v885
      %vm892 = vweird.f32 %v886
      %vm893 = vmor %vm891, %vm892
      %v894 = vsel %vm893, %v886, %v890
      %v895 = vand.u32 2147483647, %v885
      %vm896 = vcmp.eq.f32.partialorder %v895, 8.507059e+37
      %v897 = vand.u32 %v885, 2147483648
      %v898 = vor.u32 1.1754944e-38, %v897
      %v899 = vsel %vm896, %v898, %v894
      %v900 = vmul.f32 %v875, %v899
      %v901 = vmin.f32 %v900, 1.0
      %v902 = vmax.f32 %v901, -1.0
      %v903 = vmul.f32 %v731, %v731
      %v904 = vmin.f32 16.0, %v903
      %v905 = vmul.f32 %v904, 2.1237322e-06
      %v906 = vadd.f32 %v905, 0.00028619796
      %v907 = vmul.f32 %v904, %v906
      %v908 = vadd.f32 %v907, 0.0036580483
      %v909 = vmul.f32 %v904, %v908
      %v910 = vadd.f32 %v909, 0.05243302
      %v911 = vmul.f32 %v904, %v910
      %v912 = vadd.f32 %v911, 0.18741608
      %v913 = vmul.f32 %v904, %v912
      %v914 = vadd.f32 %v913, 1.1283791
      %v915 = vmul.f32 %v731, %v914
      %v916 = vmul.f32 %v904, 3.8918573e-05
      %v917 = vadd.f32 %v916, 0.001143296
      %v918 = vmul.f32 %v904, %v917
      %v919 = vadd.f32 %v918, 0.014752088
      %v920 = vmul.f32 %v904, %v919
      %v921 = vadd.f32 %v920, 0.112945676
      %v922 = vmul.f32 %v904, %v921
      %v923 = vadd.f32 %v922, 0.4994258
      %v924 = vmul.f32 %v904, %v923
      %v925 = vadd.f32 %v924, 1.0
      %v926 = vrcp.pop %v925
      %v927 = vmul.f32 %v925, %v926
      %v928 = vsub.f32 1.0, %v927
      %v929 = vmul.f32 %v926, %v928
      %v930 = vadd.f32 %v926, %v929
      %vm931 = vweird.f32 %v925
      %vm932 = vweird.f32 %v926
      %vm933 = vmor %vm931, %vm932
      %v934 = vsel %vm933, %v926, %v930
      %v935 = vand.u32 2147483647, %v925
      %vm936 = vcmp.eq.f32.partialorder %v935, 8.507059e+37
      %v937 = vand.u32 %v925, 2147483648
      %v938 = vor.u32 1.1754944e-38, %v937
      %v939 = vsel %vm936, %v938, %v934
      %v940 = vmul.f32 %v915, %v939
      %v941 = vmin.f32 %v940, 1.0
      %v942 = vmax.f32 %v941, -1.0
      %v943 = vmul.f32 %v732, %v732
      %v944 = vmin.f32 16.0, %v943
      %v945 = vmul.f32 %v944, 2.1237322e-06
      %v946 = vadd.f32 %v945, 0.00028619796
      %v947 = vmul.f32 %v944, %v946
      %v948 = vadd.f32 %v947, 0.0036580483
      %v949 = vmul.f32 %v944, %v948
      %v950 = vadd.f32 %v949, 0.05243302
      %v951 = vmul.f32 %v944, %v950
      %v952 = vadd.f32 %v951, 0.18741608
      %v953 = vmul.f32 %v944, %v952
      %v954 = vadd.f32 %v953, 1.1283791
      %v955 = vmul.f32 %v732, %v954
      %v956 = vmul.f32 %v944, 3.8918573e-05
      %v957 = vadd.f32 %v956, 0.001143296
      %v958 = vmul.f32 %v944, %v957
      %v959 = vadd.f32 %v958, 0.014752088
      %v960 = vmul.f32 %v944, %v959
      %v961 = vadd.f32 %v960, 0.112945676
      %v962 = vmul.f32 %v944, %v961
      %v963 = vadd.f32 %v962, 0.4994258
      %v964 = vmul.f32 %v944, %v963
      %v965 = vadd.f32 %v964, 1.0
      %v966 = vrcp.pop %v965
      %v967 = vmul.f32 %v965, %v966
      %v968 = vsub.f32 1.0, %v967
      %v969 = vmul.f32 %v966, %v968
      %v970 = vadd.f32 %v966, %v969
      %vm971 = vweird.f32 %v965
      %vm972 = vweird.f32 %v966
      %vm973 = vmor %vm971, %vm972
      %v974 = vsel %vm973, %v966, %v970
      %v975 = vand.u32 2147483647, %v965
      %vm976 = vcmp.eq.f32.partialorder %v975, 8.507059e+37
      %v977 = vand.u32 %v965, 2147483648
      %v978 = vor.u32 1.1754944e-38, %v977
      %v979 = vsel %vm976, %v978, %v974
      %v980 = vmul.f32 %v955, %v979
      %v981 = vmin.f32 %v980, 1.0
      %v982 = vmax.f32 %v981, -1.0
      %v983 = vmul.f32 %v733, %v733
      %v984 = vmin.f32 16.0, %v983
      %v985 = vmul.f32 %v984, 2.1237322e-06
      %v986 = vadd.f32 %v985, 0.00028619796
      %v987 = vmul.f32 %v984, %v986
      %v988 = vadd.f32 %v987, 0.0036580483
      %v989 = vmul.f32 %v984, %v988
      %v990 = vadd.f32 %v989, 0.05243302
      %v991 = vmul.f32 %v984, %v990
      %v992 = vadd.f32 %v991, 0.18741608
      %v993 = vmul.f32 %v984, %v992
      %v994 = vadd.f32 %v993, 1.1283791
      %v995 = vmul.f32 %v733, %v994
      %v996 = vmul.f32 %v984, 3.8918573e-05
      %v997 = vadd.f32 %v996, 0.001143296
      %v998 = vmul.f32 %v984, %v997
      %v999 = vadd.f32 %v998, 0.014752088
      %v1000 = vmul.f32 %v984, %v999
      %v1001 = vadd.f32 %v1000, 0.112945676
      %v1002 = vmul.f32 %v984, %v1001
      %v1003 = vadd.f32 %v1002, 0.4994258
      %v1004 = vmul.f32 %v984, %v1003
      %v1005 = vadd.f32 %v1004, 1.0
      %v1006 = vrcp.pop %v1005
      %v1007 = vmul.f32 %v1005, %v1006
      %v1008 = vsub.f32 1.0, %v1007
      %v1009 = vmul.f32 %v1006, %v1008
      %v1010 = vadd.f32 %v1006, %v1009
      %vm1011 = vweird.f32 %v1005
      %vm1012 = vweird.f32 %v1006
      %vm1013 = vmor %vm1011, %vm1012
      %v1014 = vsel %vm1013, %v1006, %v1010
      %v1015 = vand.u32 2147483647, %v1005
      %vm1016 = vcmp.eq.f32.partialorder %v1015, 8.507059e+37
      %v1017 = vand.u32 %v1005, 2147483648
      %v1018 = vor.u32 1.1754944e-38, %v1017
      %v1019 = vsel %vm1016, %v1018, %v1014
      %v1020 = vmul.f32 %v995, %v1019
      %v1021 = vmin.f32 %v1020, 1.0
      %v1022 = vmax.f32 %v1021, -1.0
      %v1023 = vmul.f32 %v734, %v734
      %v1024 = vmin.f32 16.0, %v1023
      %v1025 = vmul.f32 %v1024, 2.1237322e-06
      %v1026 = vadd.f32 %v1025, 0.00028619796
      %v1027 = vmul.f32 %v1024, %v1026
      %v1028 = vadd.f32 %v1027, 0.0036580483
      %v1029 = vmul.f32 %v1024, %v1028
      %v1030 = vadd.f32 %v1029, 0.05243302
      %v1031 = vmul.f32 %v1024, %v1030
      %v1032 = vadd.f32 %v1031, 0.18741608
      %v1033 = vmul.f32 %v1024, %v1032
      %v1034 = vadd.f32 %v1033, 1.1283791
      %v1035 = vmul.f32 %v734, %v1034
      %v1036 = vmul.f32 %v1024, 3.8918573e-05
      %v1037 = vadd.f32 %v1036, 0.001143296
      %v1038 = vmul.f32 %v1024, %v1037
      %v1039 = vadd.f32 %v1038, 0.014752088
      %v1040 = vmul.f32 %v1024, %v1039
      %v1041 = vadd.f32 %v1040, 0.112945676
      %v1042 = vmul.f32 %v1024, %v1041
      %v1043 = vadd.f32 %v1042, 0.4994258
      %v1044 = vmul.f32 %v1024, %v1043
      %v1045 = vadd.f32 %v1044, 1.0
      %v1046 = vrcp.pop %v1045
      %v1047 = vmul.f32 %v1045, %v1046
      %v1048 = vsub.f32 1.0, %v1047
      %v1049 = vmul.f32 %v1046, %v1048
      %v1050 = vadd.f32 %v1046, %v1049
      %vm1051 = vweird.f32 %v1045
      %vm1052 = vweird.f32 %v1046
      %vm1053 = vmor %vm1051, %vm1052
      %v1054 = vsel %vm1053, %v1046, %v1050
      %v1055 = vand.u32 2147483647, %v1045
      %vm1056 = vcmp.eq.f32.partialorder %v1055, 8.507059e+37
      %v1057 = vand.u32 %v1045, 2147483648
      %v1058 = vor.u32 1.1754944e-38, %v1057
      %v1059 = vsel %vm1056, %v1058, %v1054
      %v1060 = vmul.f32 %v1035, %v1059
      %v1061 = vmin.f32 %v1060, 1.0
      %v1062 = vmax.f32 %v1061, -1.0
      %v1063 = vmul.f32 %v735, %v735
      %v1064 = vmin.f32 16.0, %v1063
      %v1065 = vmul.f32 %v1064, 2.1237322e-06
      %v1066 = vadd.f32 %v1065, 0.00028619796
      %v1067 = vmul.f32 %v1064, %v1066
      %v1068 = vadd.f32 %v1067, 0.0036580483
      %v1069 = vmul.f32 %v1064, %v1068
      %v1070 = vadd.f32 %v1069, 0.05243302
      %v1071 = vmul.f32 %v1064, %v1070
      %v1072 = vadd.f32 %v1071, 0.18741608
      %v1073 = vmul.f32 %v1064, %v1072
      %v1074 = vadd.f32 %v1073, 1.1283791
      %v1075 = vmul.f32 %v735, %v1074
      %v1076 = vmul.f32 %v1064, 3.8918573e-05
      %v1077 = vadd.f32 %v1076, 0.001143296
      %v1078 = vmul.f32 %v1064, %v1077
      %v1079 = vadd.f32 %v1078, 0.014752088
      %v1080 = vmul.f32 %v1064, %v1079
      %v1081 = vadd.f32 %v1080, 0.112945676
      %v1082 = vmul.f32 %v1064, %v1081
      %v1083 = vadd.f32 %v1082, 0.4994258
      %v1084 = vmul.f32 %v1064, %v1083
      %v1085 = vadd.f32 %v1084, 1.0
      %v1086 = vrcp.pop %v1085
      %v1087 = vmul.f32 %v1085, %v1086
      %v1088 = vsub.f32 1.0, %v1087
      %v1089 = vmul.f32 %v1086, %v1088
      %v1090 = vadd.f32 %v1086, %v1089
      %vm1091 = vweird.f32 %v1085
      %vm1092 = vweird.f32 %v1086
      %vm1093 = vmor %vm1091, %vm1092
      %v1094 = vsel %vm1093, %v1086, %v1090
      %v1095 = vand.u32 2147483647, %v1085
      %vm1096 = vcmp.eq.f32.partialorder %v1095, 8.507059e+37
      %v1097 = vand.u32 %v1085, 2147483648
      %v1098 = vor.u32 1.1754944e-38, %v1097
      %v1099 = vsel %vm1096, %v1098, %v1094
      %v1100 = vmul.f32 %v1075, %v1099
      %v1101 = vmin.f32 %v1100, 1.0
      %v1102 = vmax.f32 %v1101, -1.0
      %v1103 = vmul.f32 %v736, %v736
      %v1104 = vmin.f32 16.0, %v1103
      %v1105 = vmul.f32 %v1104, 2.1237322e-06
      %v1106 = vadd.f32 %v1105, 0.00028619796
      %v1107 = vmul.f32 %v1104, %v1106
      %v1108 = vadd.f32 %v1107, 0.0036580483
      %v1109 = vmul.f32 %v1104, %v1108
      %v1110 = vadd.f32 %v1109, 0.05243302
      %v1111 = vmul.f32 %v1104, %v1110
      %v1112 = vadd.f32 %v1111, 0.18741608
      %v1113 = vmul.f32 %v1104, %v1112
      %v1114 = vadd.f32 %v1113, 1.1283791
      %v1115 = vmul.f32 %v736, %v1114
      %v1116 = vmul.f32 %v1104, 3.8918573e-05
      %v1117 = vadd.f32 %v1116, 0.001143296
      %v1118 = vmul.f32 %v1104, %v1117
      %v1119 = vadd.f32 %v1118, 0.014752088
      %v1120 = vmul.f32 %v1104, %v1119
      %v1121 = vadd.f32 %v1120, 0.112945676
      %v1122 = vmul.f32 %v1104, %v1121
      %v1123 = vadd.f32 %v1122, 0.4994258
      %v1124 = vmul.f32 %v1104, %v1123
      %v1125 = vadd.f32 %v1124, 1.0
      %v1126 = vrcp.pop %v1125
      %v1127 = vmul.f32 %v1125, %v1126
      %v1128 = vsub.f32 1.0, %v1127
      %v1129 = vmul.f32 %v1126, %v1128
      %v1130 = vadd.f32 %v1126, %v1129
      %vm1131 = vweird.f32 %v1125
      %vm1132 = vweird.f32 %v1126
      %vm1133 = vmor %vm1131, %vm1132
      %v1134 = vsel %vm1133, %v1126, %v1130
      %v1135 = vand.u32 2147483647, %v1125
      %vm1136 = vcmp.eq.f32.partialorder %v1135, 8.507059e+37
      %v1137 = vand.u32 %v1125, 2147483648
      %v1138 = vor.u32 1.1754944e-38, %v1137
      %v1139 = vsel %vm1136, %v1138, %v1134
      %v1140 = vmul.f32 %v1115, %v1139
      %v1141 = vmin.f32 %v1140, 1.0
      %v1142 = vmax.f32 %v1141, -1.0
      %v1143 = vmul.f32 %v737, %v737
      %v1144 = vmin.f32 16.0, %v1143
      %v1145 = vmul.f32 %v1144, 2.1237322e-06
      %v1146 = vadd.f32 %v1145, 0.00028619796
      %v1147 = vmul.f32 %v1144, %v1146
      %v1148 = vadd.f32 %v1147, 0.0036580483
      %v1149 = vmul.f32 %v1144, %v1148
      %v1150 = vadd.f32 %v1149, 0.05243302
      %v1151 = vmul.f32 %v1144, %v1150
      %v1152 = vadd.f32 %v1151, 0.18741608
      %v1153 = vmul.f32 %v1144, %v1152
      %v1154 = vadd.f32 %v1153, 1.1283791
      %v1155 = vmul.f32 %v737, %v1154
      %v1156 = vmul.f32 %v1144, 3.8918573e-05
      %v1157 = vadd.f32 %v1156, 0.001143296
      %v1158 = vmul.f32 %v1144, %v1157
      %v1159 = vadd.f32 %v1158, 0.014752088
      %v1160 = vmul.f32 %v1144, %v1159
      %v1161 = vadd.f32 %v1160, 0.112945676
      %v1162 = vmul.f32 %v1144, %v1161
      %v1163 = vadd.f32 %v1162, 0.4994258
      %v1164 = vmul.f32 %v1144, %v1163
      %v1165 = vadd.f32 %v1164, 1.0
      %v1166 = vrcp.pop %v1165
      %v1167 = vmul.f32 %v1165, %v1166
      %v1168 = vsub.f32 1.0, %v1167
      %v1169 = vmul.f32 %v1166, %v1168
      %v1170 = vadd.f32 %v1166, %v1169
      %vm1171 = vweird.f32 %v1165
      %vm1172 = vweird.f32 %v1166
      %vm1173 = vmor %vm1171, %vm1172
      %v1174 = vsel %vm1173, %v1166, %v1170
      %v1175 = vand.u32 2147483647, %v1165
      %vm1176 = vcmp.eq.f32.partialorder %v1175, 8.507059e+37
      %v1177 = vand.u32 %v1165, 2147483648
      %v1178 = vor.u32 1.1754944e-38, %v1177
      %v1179 = vsel %vm1176, %v1178, %v1174
      %v1180 = vmul.f32 %v1155, %v1179
      %v1181 = vmin.f32 %v1180, 1.0
      %v1182 = vmax.f32 %v1181, -1.0
      %v1183 = vmul.f32 %v738, %v738
      %v1184 = vmin.f32 16.0, %v1183
      %v1185 = vmul.f32 %v1184, 2.1237322e-06
      %v1186 = vadd.f32 %v1185, 0.00028619796
      %v1187 = vmul.f32 %v1184, %v1186
      %v1188 = vadd.f32 %v1187, 0.0036580483
      %v1189 = vmul.f32 %v1184, %v1188
      %v1190 = vadd.f32 %v1189, 0.05243302
      %v1191 = vmul.f32 %v1184, %v1190
      %v1192 = vadd.f32 %v1191, 0.18741608
      %v1193 = vmul.f32 %v1184, %v1192
      %v1194 = vadd.f32 %v1193, 1.1283791
      %v1195 = vmul.f32 %v738, %v1194
      %v1196 = vmul.f32 %v1184, 3.8918573e-05
      %v1197 = vadd.f32 %v1196, 0.001143296
      %v1198 = vmul.f32 %v1184, %v1197
      %v1199 = vadd.f32 %v1198, 0.014752088
      %v1200 = vmul.f32 %v1184, %v1199
      %v1201 = vadd.f32 %v1200, 0.112945676
      %v1202 = vmul.f32 %v1184, %v1201
      %v1203 = vadd.f32 %v1202, 0.4994258
      %v1204 = vmul.f32 %v1184, %v1203
      %v1205 = vadd.f32 %v1204, 1.0
      %v1206 = vrcp.pop %v1205
      %v1207 = vmul.f32 %v1205, %v1206
      %v1208 = vsub.f32 1.0, %v1207
      %v1209 = vmul.f32 %v1206, %v1208
      %v1210 = vadd.f32 %v1206, %v1209
      %vm1211 = vweird.f32 %v1205
      %vm1212 = vweird.f32 %v1206
      %vm1213 = vmor %vm1211, %vm1212
      %v1214 = vsel %vm1213, %v1206, %v1210
      %v1215 = vand.u32 2147483647, %v1205
      %vm1216 = vcmp.eq.f32.partialorder %v1215, 8.507059e+37
      %v1217 = vand.u32 %v1205, 2147483648
      %v1218 = vor.u32 1.1754944e-38, %v1217
      %v1219 = vsel %vm1216, %v1218, %v1214
      %v1220 = vmul.f32 %v1195, %v1219
      %v1221 = vmin.f32 %v1220, 1.0
      %v1222 = vmax.f32 %v1221, -1.0
      %v1223 = vmul.f32 %v739, %v739
      %v1224 = vmin.f32 16.0, %v1223
      %v1225 = vmul.f32 %v1224, 2.1237322e-06
      %v1226 = vadd.f32 %v1225, 0.00028619796
      %v1227 = vmul.f32 %v1224, %v1226
      %v1228 = vadd.f32 %v1227, 0.0036580483
      %v1229 = vmul.f32 %v1224, %v1228
      %v1230 = vadd.f32 %v1229, 0.05243302
      %v1231 = vmul.f32 %v1224, %v1230
      %v1232 = vadd.f32 %v1231, 0.18741608
      %v1233 = vmul.f32 %v1224, %v1232
      %v1234 = vadd.f32 %v1233, 1.1283791
      %v1235 = vmul.f32 %v739, %v1234
      %v1236 = vmul.f32 %v1224, 3.8918573e-05
      %v1237 = vadd.f32 %v1236, 0.001143296
      %v1238 = vmul.f32 %v1224, %v1237
      %v1239 = vadd.f32 %v1238, 0.014752088
      %v1240 = vmul.f32 %v1224, %v1239
      %v1241 = vadd.f32 %v1240, 0.112945676
      %v1242 = vmul.f32 %v1224, %v1241
      %v1243 = vadd.f32 %v1242, 0.4994258
      %v1244 = vmul.f32 %v1224, %v1243
      %v1245 = vadd.f32 %v1244, 1.0
      %v1246 = vrcp.pop %v1245
      %v1247 = vmul.f32 %v1245, %v1246
      %v1248 = vsub.f32 1.0, %v1247
      %v1249 = vmul.f32 %v1246, %v1248
      %v1250 = vadd.f32 %v1246, %v1249
      %vm1251 = vweird.f32 %v1245
      %vm1252 = vweird.f32 %v1246
      %vm1253 = vmor %vm1251, %vm1252
      %v1254 = vsel %vm1253, %v1246, %v1250
      %v1255 = vand.u32 2147483647, %v1245
      %vm1256 = vcmp.eq.f32.partialorder %v1255, 8.507059e+37
      %v1257 = vand.u32 %v1245, 2147483648
      %v1258 = vor.u32 1.1754944e-38, %v1257
      %v1259 = vsel %vm1256, %v1258, %v1254
      %v1260 = vmul.f32 %v1235, %v1259
      %v1261 = vmin.f32 %v1260, 1.0
      %v1262 = vmax.f32 %v1261, -1.0
      %v1263 = vmul.f32 %v740, %v740
      %v1264 = vmin.f32 16.0, %v1263
      %v1265 = vmul.f32 %v1264, 2.1237322e-06
      %v1266 = vadd.f32 %v1265, 0.00028619796
      %v1267 = vmul.f32 %v1264, %v1266
      %v1268 = vadd.f32 %v1267, 0.0036580483
      %v1269 = vmul.f32 %v1264, %v1268
      %v1270 = vadd.f32 %v1269, 0.05243302
      %v1271 = vmul.f32 %v1264, %v1270
      %v1272 = vadd.f32 %v1271, 0.18741608
      %v1273 = vmul.f32 %v1264, %v1272
      %v1274 = vadd.f32 %v1273, 1.1283791
      %v1275 = vmul.f32 %v740, %v1274
      %v1276 = vmul.f32 %v1264, 3.8918573e-05
      %v1277 = vadd.f32 %v1276, 0.001143296
      %v1278 = vmul.f32 %v1264, %v1277
      %v1279 = vadd.f32 %v1278, 0.014752088
      %v1280 = vmul.f32 %v1264, %v1279
      %v1281 = vadd.f32 %v1280, 0.112945676
      %v1282 = vmul.f32 %v1264, %v1281
      %v1283 = vadd.f32 %v1282, 0.4994258
      %v1284 = vmul.f32 %v1264, %v1283
      %v1285 = vadd.f32 %v1284, 1.0
      %v1286 = vrcp.pop %v1285
      %v1287 = vmul.f32 %v1285, %v1286
      %v1288 = vsub.f32 1.0, %v1287
      %v1289 = vmul.f32 %v1286, %v1288
      %v1290 = vadd.f32 %v1286, %v1289
      %vm1291 = vweird.f32 %v1285
      %vm1292 = vweird.f32 %v1286
      %vm1293 = vmor %vm1291, %vm1292
      %v1294 = vsel %vm1293, %v1286, %v1290
      %v1295 = vand.u32 2147483647, %v1285
      %vm1296 = vcmp.eq.f32.partialorder %v1295, 8.507059e+37
      %v1297 = vand.u32 %v1285, 2147483648
      %v1298 = vor.u32 1.1754944e-38, %v1297
      %v1299 = vsel %vm1296, %v1298, %v1294
      %v1300 = vmul.f32 %v1275, %v1299
      %v1301 = vmin.f32 %v1300, 1.0
      %v1302 = vmax.f32 %v1301, -1.0
      %v1303 = vmul.f32 %v741, %v741
      %v1304 = vmin.f32 16.0, %v1303
      %v1305 = vmul.f32 %v1304, 2.1237322e-06
      %v1306 = vadd.f32 %v1305, 0.00028619796
      %v1307 = vmul.f32 %v1304, %v1306
      %v1308 = vadd.f32 %v1307, 0.0036580483
      %v1309 = vmul.f32 %v1304, %v1308
      %v1310 = vadd.f32 %v1309, 0.05243302
      %v1311 = vmul.f32 %v1304, %v1310
      %v1312 = vadd.f32 %v1311, 0.18741608
      %v1313 = vmul.f32 %v1304, %v1312
      %v1314 = vadd.f32 %v1313, 1.1283791
      %v1315 = vmul.f32 %v741, %v1314
      %v1316 = vmul.f32 %v1304, 3.8918573e-05
      %v1317 = vadd.f32 %v1316, 0.001143296
      %v1318 = vmul.f32 %v1304, %v1317
      %v1319 = vadd.f32 %v1318, 0.014752088
      %v1320 = vmul.f32 %v1304, %v1319
      %v1321 = vadd.f32 %v1320, 0.112945676
      %v1322 = vmul.f32 %v1304, %v1321
      %v1323 = vadd.f32 %v1322, 0.4994258
      %v1324 = vmul.f32 %v1304, %v1323
      %v1325 = vadd.f32 %v1324, 1.0
      %v1326 = vrcp.pop %v1325
      %v1327 = vmul.f32 %v1325, %v1326
      %v1328 = vsub.f32 1.0, %v1327
      %v1329 = vmul.f32 %v1326, %v1328
      %v1330 = vadd.f32 %v1326, %v1329
      %vm1331 = vweird.f32 %v1325
      %vm1332 = vweird.f32 %v1326
      %vm1333 = vmor %vm1331, %vm1332
      %v1334 = vsel %vm1333, %v1326, %v1330
      %v1335 = vand.u32 2147483647, %v1325
      %vm1336 = vcmp.eq.f32.partialorder %v1335, 8.507059e+37
      %v1337 = vand.u32 %v1325, 2147483648
      %v1338 = vor.u32 1.1754944e-38, %v1337
      %v1339 = vsel %vm1336, %v1338, %v1334
      %v1340 = vmul.f32 %v1315, %v1339
      %v1341 = vmin.f32 %v1340, 1.0
      %v1342 = vmax.f32 %v1341, -1.0
      %v1343 = vmul.f32 %v742, %v742
      %v1344 = vmin.f32 16.0, %v1343
      %v1345 = vmul.f32 %v1344, 2.1237322e-06
      %v1346 = vadd.f32 %v1345, 0.00028619796
      %v1347 = vmul.f32 %v1344, %v1346
      %v1348 = vadd.f32 %v1347, 0.0036580483
      %v1349 = vmul.f32 %v1344, %v1348
      %v1350 = vadd.f32 %v1349, 0.05243302
      %v1351 = vmul.f32 %v1344, %v1350
      %v1352 = vadd.f32 %v1351, 0.18741608
      %v1353 = vmul.f32 %v1344, %v1352
      %v1354 = vadd.f32 %v1353, 1.1283791
      %v1355 = vmul.f32 %v742, %v1354
      %v1356 = vmul.f32 %v1344, 3.8918573e-05
      %v1357 = vadd.f32 %v1356, 0.001143296
      %v1358 = vmul.f32 %v1344, %v1357
      %v1359 = vadd.f32 %v1358, 0.014752088
      %v1360 = vmul.f32 %v1344, %v1359
      %v1361 = vadd.f32 %v1360, 0.112945676
      %v1362 = vmul.f32 %v1344, %v1361
      %v1363 = vadd.f32 %v1362, 0.4994258
      %v1364 = vmul.f32 %v1344, %v1363
      %v1365 = vadd.f32 %v1364, 1.0
      %v1366 = vrcp.pop %v1365
      %v1367 = vmul.f32 %v1365, %v1366
      %v1368 = vsub.f32 1.0, %v1367
      %v1369 = vmul.f32 %v1366, %v1368
      %v1370 = vadd.f32 %v1366, %v1369
      %vm1371 = vweird.f32 %v1365
      %vm1372 = vweird.f32 %v1366
      %vm1373 = vmor %vm1371, %vm1372
      %v1374 = vsel %vm1373, %v1366, %v1370
      %v1375 = vand.u32 2147483647, %v1365
      %vm1376 = vcmp.eq.f32.partialorder %v1375, 8.507059e+37
      %v1377 = vand.u32 %v1365, 2147483648
      %v1378 = vor.u32 1.1754944e-38, %v1377
      %v1379 = vsel %vm1376, %v1378, %v1374
      %v1380 = vmul.f32 %v1355, %v1379
      %v1381 = vmin.f32 %v1380, 1.0
      %v1382 = vmax.f32 %v1381, -1.0
      %v1383 = vadd.f32 %v782, 1.0
      %v1384 = vadd.f32 %v822, 1.0
      %v1385 = vadd.f32 %v862, 1.0
      %v1386 = vadd.f32 %v902, 1.0
      %v1387 = vadd.f32 %v942, 1.0
      %v1388 = vadd.f32 %v982, 1.0
      %v1389 = vadd.f32 %v1022, 1.0
      %v1390 = vadd.f32 %v1062, 1.0
      %v1391 = vadd.f32 %v1102, 1.0
      %v1392 = vadd.f32 %v1142, 1.0
      %v1393 = vadd.f32 %v1182, 1.0
      %v1394 = vadd.f32 %v1222, 1.0
      %v1395 = vadd.f32 %v1262, 1.0
      %v1396 = vadd.f32 %v1302, 1.0
      %v1397 = vadd.f32 %v1342, 1.0
      %v1398 = vadd.f32 %v1382, 1.0
      %v1399 = vmul.f32 %v711, %v1383
      %v1400 = vmul.f32 %v712, %v1384
      %v1401 = vmul.f32 %v713, %v1385
      %v1402 = vmul.f32 %v714, %v1386
      %v1403 = vmul.f32 %v715, %v1387
      %v1404 = vmul.f32 %v716, %v1388
      %v1405 = vmul.f32 %v717, %v1389
      %v1406 = vmul.f32 %v718, %v1390
      %v1407 = vmul.f32 %v719, %v1391
      %v1408 = vmul.f32 %v720, %v1392
      %v1409 = vmul.f32 %v721, %v1393
      %v1410 = vmul.f32 %v722, %v1394
      %v1411 = vmul.f32 %v723, %v1395
      %v1412 = vmul.f32 %v724, %v1396
      %v1413 = vmul.f32 %v725, %v1397
      %v1414 = vmul.f32 %v726, %v1398
      %v1415 = vpack.c.bf16 %v1399, %v1399
      %v1416 = vpack.c.bf16 %v1400, %v1400
      %v1417 = vpack.c.bf16 %v1401, %v1401
      %v1418 = vpack.c.bf16 %v1402, %v1402
      %v1419 = vpack.c.bf16 %v1403, %v1403
      %v1420 = vpack.c.bf16 %v1404, %v1404
      %v1421 = vpack.c.bf16 %v1405, %v1405
      %v1422 = vpack.c.bf16 %v1406, %v1406
      %v1423 = vpack.c.bf16 %v1407, %v1407
      %v1424 = vpack.c.bf16 %v1408, %v1408
      %v1425 = vpack.c.bf16 %v1409, %v1409
      %v1426 = vpack.c.bf16 %v1410, %v1410
      %v1427 = vpack.c.bf16 %v1411, %v1411
      %v1428 = vpack.c.bf16 %v1412, %v1412
      %v1429 = vpack.c.bf16 %v1413, %v1413
      %v1430 = vpack.c.bf16 %v1414, %v1414
      %vm1431 = vcmask 125952
      %1432 = vst.msk [vmem:[%s239] sm:$0xf] %vm1431, %v1415
      %1433 = vst.msk [vmem:[%s239 + $0x4] sm:$0xf] %vm1431, %v1416
      %1434 = vst.msk [vmem:[%s239 + $0x8] sm:$0xf] %vm1431, %v1417
      %1435 = vst.msk [vmem:[%s239 + $0xc] sm:$0xf] %vm1431, %v1418
      %1436 = vst.msk [vmem:[%s239 + $0x10] sm:$0xf] %vm1431, %v1419
      %1437 = vst.msk [vmem:[%s239 + $0x14] sm:$0xf] %vm1431, %v1420
      %1438 = vst.msk [vmem:[%s239 + $0x18] sm:$0xf] %vm1431, %v1421
      %1439 = vst.msk [vmem:[%s239 + $0x1c] sm:$0xf] %vm1431, %v1422
      %1440 = vst.msk [vmem:[%s239 + $0x20] sm:$0xf] %vm1431, %v1423
      %1441 = vst.msk [vmem:[%s239 + $0x24] sm:$0xf] %vm1431, %v1424
      %1442 = vst.msk [vmem:[%s239 + $0x28] sm:$0xf] %vm1431, %v1425
      %1443 = vst.msk [vmem:[%s239 + $0x2c] sm:$0xf] %vm1431, %v1426
      %1444 = vst.msk [vmem:[%s239 + $0x30] sm:$0xf] %vm1431, %v1427
      %1445 = vst.msk [vmem:[%s239 + $0x34] sm:$0xf] %vm1431, %v1428
      %1446 = vst.msk [vmem:[%s239 + $0x38] sm:$0xf] %vm1431, %v1429
      %1447 = vst.msk [vmem:[%s239 + $0x3c] sm:$0xf] %vm1431, %v1430
      %s1448 = smul.u32 16, %s20
      %p1449 = scmp.lt.s32.totalorder %s19, 1
      %s1450 = scalar_select %p1449, %s19, 1
      %p1451 = scmp.lt.s32.totalorder %s1448, 15
      %s1452 = scalar_select %p1451, %s1448, 15
      %s1453 = smul.addr %s1450, 16
      %s1454 = sadd.s32 %s1452, %s1453
      %s1455 = smul.addr %s1454, 4
      %s1456 = scalar_lea.vmem %s4, %s1455
      // Predicated region
      $region37: #{tpu_custom_call.1} parent=35 // pred_check
        %p1457 = pneg %p141
      $region38: #{tpu_custom_call.1} parent=35 // pred_check_branch
        %1459 = sbr.rel (%p1457) target = $region40
      $region39: #{tpu_custom_call.1} parent=35 // pred_region
        %s1460 = smul.u32 16, %s20
      $region40: #{tpu_custom_call.1} parent=35 // pred_fallthru
        _
    $region36: #{tpu_custom_call.1} parent=5 // pred_fallthru
      _
    %p1461 = scmp.le.s32.totalorder 2, %s10
    // Predicated region
    $region41: #{tpu_custom_call.1} parent=5 // pred_check
      %p1462 = pneg %p1461
    $region42: #{tpu_custom_call.1} parent=5 // pred_check_branch
      %1464 = sbr.rel (%p1462) target = $region44
    $region43: #{tpu_custom_call.1} parent=5 // pred_region
      %s1465 = ssub.s32 %s10, 2
      // Predicated region
      $region45: #{tpu_custom_call.1} parent=43 // pred_check
        %p1466 = pneg %p147
      $region46: #{tpu_custom_call.1} parent=43 // pred_check_branch
        %1468 = sbr.rel (%p1466) target = $region48
      $region47: #{tpu_custom_call.1} parent=43 // pred_region
        %s1469 = smul.u32 16, %s22
        %p1470 = scmp.lt.s32.totalorder %s21, 1
        %s1471 = scalar_select %p1470, %s21, 1
        %p1472 = scmp.lt.s32.totalorder %s1469, 15
        %s1473 = scalar_select %p1472, %s1469, 15
        %s1474 = smul.addr %s1471, 16
        %s1475 = sadd.s32 %s1473, %s1474
        %s1476 = smul.addr %s1475, 4
        %s1477 = scalar_lea.vmem %s4, %s1476
      $region48: #{tpu_custom_call.1} parent=43 // pred_fallthru
        _
    $region44: #{tpu_custom_call.1} parent=5 // pred_fallthru
      _
  $region6: #{tpu_custom_call.1} parent=0 // loop_footer
    %s14 = sadd.s32 1, %s10
  $region7: #{tpu_custom_call.1} parent=0 // loop_footer_branch
    %9 = sbr.rel target = $region3
  $region8: #{tpu_custom_call.1} parent=0 // loop_exit
    _

</llo_original>
